<compile_context>
chip_gen: v7x
topology: tpu7x:2x2x1
jax: 0.10.0
libtpu: 0.0.40
codegen_flags: <defaults>
</compile_context>

<pallas_src>
import functools

import numpy as np
import jax
import jax.numpy as jnp
from jax.experimental import pallas as pl
from jax.experimental.pallas import tpu as pltpu

TN = 128       # lane tile (output channels)  -- 128-aligned for v5e; v6e/v7x could use 256
TK = 128       # contraction tile
TM_MAX = 256   # row tile over N*Ho*Wo (fits comfortably in 64 MiB VMEM on v7x)


def _round_up(x, m):
    return (x + m - 1) // m * m


def _pick_tm(m):
    # largest row tile <= TM_MAX, kept 16-aligned (safe for bf16 (16,128) tiling)
    return min(TM_MAX, _round_up(m, 16))


# --------------------------- Pallas kernels ---------------------------

def _conv_mm_stats_kernel(a_ref, w_ref, b_ref, o_ref, s_ref, acc_ref, *, m_valid, tm):
    """One (n, m, k) grid step of  out = A @ W + bias  with a fused BatchNorm
    statistics epilogue (per-channel sum and sum-of-squares over valid rows).

    A:(tm,TK) bf16   W:(TK,TN) bf16   bias:(1,TN) f32
    out:(tm,TN) f32  stats:(2,TN) f32 (resident across the m,k axes)
    acc: f32 VMEM scratch, reduction over the k grid axis.
    """
    m = pl.program_id(1)
    k = pl.program_id(2)

    @pl.when(k == 0)
    def _init_acc():
        acc_ref[...] = jnp.zeros_like(acc_ref)

    @pl.when(jnp.logical_and(m == 0, k == 0))
    def _init_stats():
        s_ref[...] = jnp.zeros_like(s_ref)

    acc_ref[...] += jnp.dot(a_ref[...], w_ref[...],
                            preferred_element_type=jnp.float32)

    @pl.when(k == pl.num_programs(2) - 1)
    def _finalize():
        y = acc_ref[...] + b_ref[...]                       # (tm, TN) f32
        o_ref[...] = y
        # rows >= m_valid are zero-padded im2col rows -> keep them out of the stats
        row = jax.lax.broadcasted_iota(jnp.int32, (tm, 1), 0) + m * tm
        valid = (row < m_valid).astype(jnp.float32)
        yv = y * valid
        s_ref[...] += jnp.concatenate(
            [jnp.sum(yv, axis=0, keepdims=True),
             jnp.sum(yv * y, axis=0, keepdims=True)], axis=0)


def _bn_relu_kernel(x_ref, s_ref, g_ref, b_ref, o_ref, *, count, eps):
    """Training-mode BatchNorm (from fused sum/sumsq stats) + ReLU, tiled over rows."""
    s = s_ref[...]
    inv_n = 1.0 / count
    mean = s[0:1, :] * inv_n
    var = s[1:2, :] * inv_n - mean * mean                   # biased variance (torch training)
    scale = g_ref[...] * jax.lax.rsqrt(var + eps)
    shift = b_ref[...] - mean * scale
    o_ref[...] = jnp.maximum(x_ref[...] * scale + shift, 0.0).astype(o_ref.dtype)


# ------------------------------ wrappers ------------------------------

def _im2col(x_nhwc, k, stride, pad):
    n, h, w, c = x_nhwc.shape
    xp = jnp.pad(x_nhwc, ((0, 0), (pad, pad), (pad, pad), (0, 0)))
    ho = (h + 2 * pad - k) // stride + 1
    wo = (w + 2 * pad - k) // stride + 1
    cols = []
    for kh in range(k):
        for kw in range(k):
            cols.append(xp[:, kh:kh + stride * ho:stride, kw:kw + stride * wo:stride, :])
    patches = jnp.stack(cols, axis=3)                       # (n, ho, wo, k*k, c)
    return patches.reshape(n * ho * wo, k * k * c), ho, wo


def conv2d_bias_stats(x_nhwc, w_oihw, bias, stride, pad, n_pad):
    """nn.Conv2d + bias as a tiled bf16 MXU matmul with lane-dense (128-padded)
    output, plus fused per-channel [sum, sumsq] over the N*Ho*Wo positions."""
    cout, cin, kh, _ = w_oihw.shape
    patches, ho, wo = _im2col(x_nhwc, kh, stride, pad)      # (M, K)
    m, k = patches.shape
    tm = _pick_tm(m)
    mp = _round_up(m, tm)
    kp = _round_up(k, TK)

    a = jnp.pad(patches.astype(jnp.bfloat16), ((0, mp - m), (0, kp - k)))
    wm = jnp.transpose(w_oihw, (2, 3, 1, 0)).reshape(k, cout)   # (kh,kw,ci) -> column
    w = jnp.pad(wm.astype(jnp.bfloat16), ((0, kp - k), (0, n_pad - cout)))
    b = jnp.pad(bias.astype(jnp.float32), (0, n_pad - cout)).reshape(1, n_pad)

    grid = (n_pad // TN, mp // tm, kp // TK)                # reduction axis last

    out, stats = pl.pallas_call(
        functools.partial(_conv_mm_stats_kernel, m_valid=m, tm=tm),
        grid=grid,
        in_specs=[
            pl.BlockSpec((tm, TK), lambda n, i, j: (i, j)),
            pl.BlockSpec((TK, TN), lambda n, i, j: (j, n)),
            pl.BlockSpec((1, TN), lambda n, i, j: (0, n)),
        ],
        out_specs=(
            pl.BlockSpec((tm, TN), lambda n, i, j: (i, n)),
            pl.BlockSpec((2, TN), lambda n, i, j: (0, n)),  # resident across (i, j)
        ),
        out_shape=(
            jax.ShapeDtypeStruct((mp, n_pad), jnp.float32),
            jax.ShapeDtypeStruct((2, n_pad), jnp.float32),
        ),
        scratch_shapes=[pltpu.VMEM((tm, TN), jnp.float32)],
        compiler_params=pltpu.CompilerParams(
            dimension_semantics=("parallel", "arbitrary", "arbitrary")),
    )(a, w, b)
    return out, stats, ho, wo, m


def bn_relu_apply(x2d, stats, gamma_p, beta_p, *, count, out_dtype):
    mp, np_ = x2d.shape
    tm = min(TM_MAX, mp)
    return pl.pallas_call(
        functools.partial(_bn_relu_kernel, count=float(count), eps=1e-5),
        grid=(mp // tm, np_ // TN),
        in_specs=[
            pl.BlockSpec((tm, TN), lambda i, n: (i, n)),
            pl.BlockSpec((2, TN), lambda i, n: (0, n)),
            pl.BlockSpec((1, TN), lambda i, n: (0, n)),
            pl.BlockSpec((1, TN), lambda i, n: (0, n)),
        ],
        out_specs=pl.BlockSpec((tm, TN), lambda i, n: (i, n)),
        out_shape=jax.ShapeDtypeStruct((mp, np_), out_dtype),
        compiler_params=pltpu.CompilerParams(
            dimension_semantics=("parallel", "parallel")),
    )(x2d, stats, gamma_p, beta_p)


# --------------------------- module forward ---------------------------

def unet_base_conv_forward(params, x_nchw, *, kernel_size, stride, padding):
    del kernel_size  # implied by the weight shapes
    n = x_nchw.shape[0]
    cout = params['conv1_w'].shape[0]
    n_pad = _round_up(cout, TN)
    gamma = jnp.pad(params['bn_g'], (0, n_pad - cout)).reshape(1, n_pad)
    beta = jnp.pad(params['bn_b'], (0, n_pad - cout)).reshape(1, n_pad)

    x = jnp.transpose(x_nchw, (0, 2, 3, 1))                 # NCHW -> NHWC (channels on lanes)

    # conv1 -> (shared) BN -> ReLU   (intermediate kept in bf16 for the next conv)
    y1, s1, ho, wo, m1 = conv2d_bias_stats(
        x, params['conv1_w'], params['conv1_b'], stride, padding, n_pad)
    a1 = bn_relu_apply(y1, s1, gamma, beta, count=m1, out_dtype=jnp.bfloat16)
    a1 = a1[:m1, :cout].reshape(n, ho, wo, cout)

    # conv2 -> (shared) BN -> ReLU
    y2, s2, ho2, wo2, m2 = conv2d_bias_stats(
        a1, params['conv2_w'], params['conv2_b'], stride, padding, n_pad)
    a2 = bn_relu_apply(y2, s2, gamma, beta, count=m2, out_dtype=jnp.float32)
    a2 = a2[:m2, :cout].reshape(n, ho2, wo2, cout)

    return jnp.transpose(a2, (0, 3, 1, 2))                  # back to NCHW


# -------------------------- pure-JAX reference --------------------------

def reference_forward(params, x, *, stride, padding):
    """Full-f32 reference with exact UNetBaseConv semantics."""
    def conv(z, w, b, s, p):
        o = jax.lax.conv_general_dilated(
            z, w, (s, s), [(p, p), (p, p)],
            dimension_numbers=('NCHW', 'OIHW', 'NCHW'),
            precision=jax.lax.Precision.HIGHEST)
        return o + b[None, :, None, None]

    def bn_relu(z, g, be):
        mu = jnp.mean(z, axis=(0, 2, 3), keepdims=True)
        var = jnp.mean((z - mu) ** 2, axis=(0, 2, 3), keepdims=True)
        zz = (z - mu) * jax.lax.rsqrt(var + 1e-5) * g[None, :, None, None] \
            + be[None, :, None, None]
        return jnp.maximum(zz, 0.0)

    y = conv(x, params['conv1_w'], params['conv1_b'], stride, padding)
    y = bn_relu(y, params['bn_g'], params['bn_b'])
    y = conv(y, params['conv2_w'], params['conv2_b'], stride, padding)
    y = bn_relu(y, params['bn_g'], params['bn_b'])
    return y


# ------------------------------- main -------------------------------

if __name__ == "__main__":
    # UNetBaseConv(in_channels=4, out_channels=8, kernel_size=3, stride, padding)
    N, Cin, H, W = 2, 4, 16, 16
    Cout, k = 8, 3

    keys = jax.random.split(jax.random.PRNGKey(0), 7)
    std = float(np.sqrt(2.0 / (k * k * Cin)))               # matches nn.init.normal_ in the module
    params = {
        'conv1_w': std * jax.random.normal(keys[0], (Cout, Cin, k, k), jnp.float32),
        'conv1_b': 0.1 * jax.random.normal(keys[1], (Cout,), jnp.float32),
        'conv2_w': std * jax.random.normal(keys[2], (Cout, Cout, k, k), jnp.float32),
        'conv2_b': 0.1 * jax.random.normal(keys[3], (Cout,), jnp.float32),
        'bn_g': 1.0 + 0.1 * jax.random.normal(keys[4], (Cout,), jnp.float32),
        'bn_b': 0.1 * jax.random.normal(keys[5], (Cout,), jnp.float32),
    }
    x = jax.random.normal(keys[6], (N, Cin, H, W), jnp.float32)   # NCHW

    # Two configs: standard 'same' conv, and a strided variant (exercises the
    # padded-row masking in the fused BN-stats epilogue).
    for (s, p) in [(1, 1), (2, 1)]:
        fwd = jax.jit(functools.partial(
            unet_base_conv_forward, kernel_size=k, stride=s, padding=p))
        out = jax.block_until_ready(fwd(params, x))
        ref = reference_forward(params, x, stride=s, padding=p)
        assert out.shape == ref.shape, (out.shape, ref.shape)
        # Pallas path uses bf16 matmul operands (f32 accumulation/bias/BN); observed
        # deviation vs. the full-f32 reference is O(1e-2) on O(1) outputs, so 5e-2
        # gives ample margin while still catching real bugs.
        np.testing.assert_allclose(np.asarray(out), np.asarray(ref),
                                   rtol=5e-2, atol=5e-2)

    print("KERNEL_OK")
</pallas_src>

<mosaic_0001>
module attributes {stable_mosaic.version = 11 : i64} {
  func.func @_conv_mm_stats_kernel(%arg0: i32, %arg1: i32, %arg2: i32, %arg3: memref<256x128xbf16, #tpu.memory_space<vmem>>, %arg4: memref<128x128xbf16, #tpu.memory_space<vmem>>, %arg5: memref<1x128xf32, #tpu.memory_space<vmem>>, %arg6: memref<256x128xf32, #tpu.memory_space<vmem>>, %arg7: memref<2x128xf32, #tpu.memory_space<vmem>>, %arg8: memref<256x128xf32, #tpu.memory_space<vmem>>) attributes {dimension_semantics = [#tpu.dimension_semantics<parallel>, #tpu.dimension_semantics<arbitrary>, #tpu.dimension_semantics<arbitrary>], iteration_bounds = array<i64: 1, 2, 1>, scalar_prefetch = 0 : i64, scratch_operands = 1 : i64, tpu.core_type = #tpu.core_type<tc>, window_params = [{transform_indices = @transform_0, window_bounds = array<i64: 256, 128>}, {transform_indices = @transform_1, window_bounds = array<i64: 128, 128>}, {transform_indices = @transform_2, window_bounds = array<i64: 1, 128>}, {transform_indices = @transform_3, window_bounds = array<i64: 256, 128>}, {transform_indices = @transform_4, window_bounds = array<i64: 2, 128>}]} {
    %c0_i32 = arith.constant 0 : i32
    %0 = arith.cmpi eq, %arg2, %c0_i32 : i32
    %1 = arith.extui %0 : i1 to i32
    %c0_i32_0 = arith.constant 0 : i32
    %2 = arith.cmpi ne, %1, %c0_i32_0 : i32
    scf.if %2 {
      %cst_13 = arith.constant 0.000000e+00 : f32
      %17 = vector.broadcast %cst_13 : f32 to vector<256x128xf32>
      %c0_14 = arith.constant 0 : index
      %c0_15 = arith.constant 0 : index
      %18 = vector.load %arg8[%c0_14, %c0_15] : memref<256x128xf32, #tpu.memory_space<vmem>>, vector<256x128xf32>
      tpu.vector_store %arg8[%c0_14, %c0_15], %17 {strides = array<i32>} : memref<256x128xf32, #tpu.memory_space<vmem>>, vector<256x128xf32>,
    } else {
    }
    %c0_i32_1 = arith.constant 0 : i32
    %3 = arith.cmpi eq, %arg1, %c0_i32_1 : i32
    %c0_i32_2 = arith.constant 0 : i32
    %4 = arith.cmpi eq, %arg2, %c0_i32_2 : i32
    %5 = arith.andi %3, %4 : i1
    %6 = arith.extui %5 : i1 to i32
    %c0_i32_3 = arith.constant 0 : i32
    %7 = arith.cmpi ne, %6, %c0_i32_3 : i32
    scf.if %7 {
      %cst_13 = arith.constant 0.000000e+00 : f32
      %17 = vector.broadcast %cst_13 : f32 to vector<2x128xf32>
      %c0_14 = arith.constant 0 : index
      %c0_15 = arith.constant 0 : index
      %18 = vector.load %arg7[%c0_14, %c0_15] : memref<2x128xf32, #tpu.memory_space<vmem>>, vector<2x128xf32>
      tpu.vector_store %arg7[%c0_14, %c0_15], %17 {strides = array<i32>} : memref<2x128xf32, #tpu.memory_space<vmem>>, vector<2x128xf32>,
    } else {
    }
    %c0 = arith.constant 0 : index
    %c0_4 = arith.constant 0 : index
    %8 = vector.load %arg8[%c0, %c0_4] : memref<256x128xf32, #tpu.memory_space<vmem>>, vector<256x128xf32>
    %c0_5 = arith.constant 0 : index
    %c0_6 = arith.constant 0 : index
    %9 = vector.load %arg3[%c0_5, %c0_6] : memref<256x128xbf16, #tpu.memory_space<vmem>>, vector<256x128xbf16>
    %c0_7 = arith.constant 0 : index
    %c0_8 = arith.constant 0 : index
    %10 = vector.load %arg4[%c0_7, %c0_8] : memref<128x128xbf16, #tpu.memory_space<vmem>>, vector<128x128xbf16>
    %cst = arith.constant dense<0.000000e+00> : vector<256x128xf32>
    %11 = tpu.matmul %9, %10, %cst {dimension_numbers = #tpu.dot_dimension_numbers<[1], [0], [0], [1], [0, 0, 1, 1], [], []>} : vector<256x128xbf16>, vector<128x128xbf16>, vector<256x128xf32> -> vector<256x128xf32>
    %12 = arith.addf %8, %11 : vector<256x128xf32>
    %c0_9 = arith.constant 0 : index
    %c0_10 = arith.constant 0 : index
    %13 = vector.load %arg8[%c0_9, %c0_10] : memref<256x128xf32, #tpu.memory_space<vmem>>, vector<256x128xf32>
    tpu.vector_store %arg8[%c0_9, %c0_10], %12 {strides = array<i32>} : memref<256x128xf32, #tpu.memory_space<vmem>>, vector<256x128xf32>,
    %c0_i32_11 = arith.constant 0 : i32
    %14 = arith.cmpi eq, %arg2, %c0_i32_11 : i32
    %15 = arith.extui %14 : i1 to i32
    %c0_i32_12 = arith.constant 0 : i32
    %16 = arith.cmpi ne, %15, %c0_i32_12 : i32
    scf.if %16 {
      %c0_13 = arith.constant 0 : index
      %c0_14 = arith.constant 0 : index
      %17 = vector.load %arg8[%c0_13, %c0_14] : memref<256x128xf32, #tpu.memory_space<vmem>>, vector<256x128xf32>
      %c0_15 = arith.constant 0 : index
      %c0_16 = arith.constant 0 : index
      %18 = vector.load %arg5[%c0_15, %c0_16] : memref<1x128xf32, #tpu.memory_space<vmem>>, vector<1x128xf32>
      %19 = vector.broadcast %18 : vector<1x128xf32> to vector<256x128xf32>
      %20 = arith.addf %17, %19 : vector<256x128xf32>
      %c0_17 = arith.constant 0 : index
      %c0_18 = arith.constant 0 : index
      %21 = vector.load %arg6[%c0_17, %c0_18] : memref<256x128xf32, #tpu.memory_space<vmem>>, vector<256x128xf32>
      tpu.vector_store %arg6[%c0_17, %c0_18], %20 {strides = array<i32>} : memref<256x128xf32, #tpu.memory_space<vmem>>, vector<256x128xf32>,
      %22 = tpu.iota {dimensions = array<i32: 0>} : vector<256x1xi32>
      %c256_i32 = arith.constant 256 : i32
      %23 = arith.muli %arg1, %c256_i32 : i32
      %24 = vector.broadcast %23 : i32 to vector<256x1xi32>
      %25 = arith.addi %22, %24 : vector<256x1xi32>
      %c512_i32 = arith.constant 512 : i32
      %26 = vector.broadcast %c512_i32 : i32 to vector<256x1xi32>
      %27 = arith.cmpi slt, %25, %26 : vector<256x1xi32>
      %28 = arith.extui %27 : vector<256x1xi1> to vector<256x1xi32>
      %29 = arith.sitofp %28 : vector<256x1xi32> to vector<256x1xf32>
      %30 = vector.broadcast %29 : vector<256x1xf32> to vector<256x128xf32>
      %31 = arith.mulf %20, %30 : vector<256x128xf32>
      %c0_19 = arith.constant 0 : index
      %c0_20 = arith.constant 0 : index
      %32 = vector.load %arg7[%c0_19, %c0_20] : memref<2x128xf32, #tpu.memory_space<vmem>>, vector<2x128xf32>
      %cst_21 = arith.constant dense<0.000000e+00> : vector<128xf32>
      %33 = vector.multi_reduction <add>, %31, %cst_21 [0] : vector<256x128xf32> to vector<128xf32>
      %34 = vector.shape_cast %33 : vector<128xf32> to vector<1x128xf32>
      %35 = arith.mulf %31, %20 : vector<256x128xf32>
      %cst_22 = arith.constant dense<0.000000e+00> : vector<128xf32>
      %36 = vector.multi_reduction <add>, %35, %cst_22 [0] : vector<256x128xf32> to vector<128xf32>
      %37 = vector.shape_cast %36 : vector<128xf32> to vector<1x128xf32>
      %38 = tpu.concatenate %34, %37 in 0 : vector<1x128xf32>, vector<1x128xf32> -> vector<2x128xf32>
      %39 = arith.addf %32, %38 : vector<2x128xf32>
      %c0_23 = arith.constant 0 : index
      %c0_24 = arith.constant 0 : index
      %40 = vector.load %arg7[%c0_23, %c0_24] : memref<2x128xf32, #tpu.memory_space<vmem>>, vector<2x128xf32>
      tpu.vector_store %arg7[%c0_23, %c0_24], %39 {strides = array<i32>} : memref<2x128xf32, #tpu.memory_space<vmem>>, vector<2x128xf32>,
    } else {
    }
    return
  }
  func.func @transform_0(%arg0: i32, %arg1: i32, %arg2: i32) -> (i32, i32) {
    %c0_i32 = arith.constant 0 : i32
    return %arg1, %arg2 : i32, i32
  }
  func.func @transform_1(%arg0: i32, %arg1: i32, %arg2: i32) -> (i32, i32) {
    %c0_i32 = arith.constant 0 : i32
    return %arg2, %arg0 : i32, i32
  }
  func.func @transform_2(%arg0: i32, %arg1: i32, %arg2: i32) -> (i32, i32) {
    %c0_i32 = arith.constant 0 : i32
    %c0_i32_0 = arith.constant 0 : i32
    return %c0_i32, %arg0 : i32, i32
  }
  func.func @transform_3(%arg0: i32, %arg1: i32, %arg2: i32) -> (i32, i32) {
    %c0_i32 = arith.constant 0 : i32
    return %arg1, %arg0 : i32, i32
  }
  func.func @transform_4(%arg0: i32, %arg1: i32, %arg2: i32) -> (i32, i32) {
    %c0_i32 = arith.constant 0 : i32
    %c0_i32_0 = arith.constant 0 : i32
    return %c0_i32, %arg0 : i32, i32
  }
}

module attributes {stable_mosaic.version = 11 : i64} {
  func.func @_bn_relu_kernel(%arg0: i32, %arg1: i32, %arg2: memref<256x128xf32, #tpu.memory_space<vmem>>, %arg3: memref<2x128xf32, #tpu.memory_space<vmem>>, %arg4: memref<1x128xf32, #tpu.memory_space<vmem>>, %arg5: memref<1x128xf32, #tpu.memory_space<vmem>>, %arg6: memref<256x128xbf16, #tpu.memory_space<vmem>>) attributes {dimension_semantics = [#tpu.dimension_semantics<parallel>, #tpu.dimension_semantics<parallel>], iteration_bounds = array<i64: 2, 1>, scalar_prefetch = 0 : i64, scratch_operands = 0 : i64, tpu.core_type = #tpu.core_type<tc>, window_params = [{transform_indices = @transform_0, window_bounds = array<i64: 256, 128>}, {transform_indices = @transform_1, window_bounds = array<i64: 2, 128>}, {transform_indices = @transform_2, window_bounds = array<i64: 1, 128>}, {transform_indices = @transform_3, window_bounds = array<i64: 1, 128>}, {transform_indices = @transform_4, window_bounds = array<i64: 256, 128>}]} {
    %c0 = arith.constant 0 : index
    %c0_0 = arith.constant 0 : index
    %0 = vector.load %arg3[%c0, %c0_0] : memref<2x128xf32, #tpu.memory_space<vmem>>, vector<2x128xf32>
    %1 = vector.extract_strided_slice %0 {offsets = [0, 0], sizes = [1, 128], strides = [1, 1]} : vector<2x128xf32> to vector<1x128xf32>
    %cst = arith.constant 0.001953125 : f32
    %2 = vector.broadcast %cst : f32 to vector<1x128xf32>
    %3 = arith.mulf %1, %2 : vector<1x128xf32>
    %4 = vector.extract_strided_slice %0 {offsets = [1, 0], sizes = [1, 128], strides = [1, 1]} : vector<2x128xf32> to vector<1x128xf32>
    %cst_1 = arith.constant 0.001953125 : f32
    %5 = vector.broadcast %cst_1 : f32 to vector<1x128xf32>
    %6 = arith.mulf %4, %5 : vector<1x128xf32>
    %7 = arith.mulf %3, %3 : vector<1x128xf32>
    %8 = arith.subf %6, %7 : vector<1x128xf32>
    %c0_2 = arith.constant 0 : index
    %c0_3 = arith.constant 0 : index
    %9 = vector.load %arg4[%c0_2, %c0_3] : memref<1x128xf32, #tpu.memory_space<vmem>>, vector<1x128xf32>
    %cst_4 = arith.constant 9.99999974E-6 : f32
    %10 = vector.broadcast %cst_4 : f32 to vector<1x128xf32>
    %11 = arith.addf %8, %10 : vector<1x128xf32>
    %12 = math.rsqrt %11 : vector<1x128xf32>
    %13 = arith.mulf %9, %12 : vector<1x128xf32>
    %c0_5 = arith.constant 0 : index
    %c0_6 = arith.constant 0 : index
    %14 = vector.load %arg5[%c0_5, %c0_6] : memref<1x128xf32, #tpu.memory_space<vmem>>, vector<1x128xf32>
    %15 = arith.mulf %3, %13 : vector<1x128xf32>
    %16 = arith.subf %14, %15 : vector<1x128xf32>
    %c0_7 = arith.constant 0 : index
    %c0_8 = arith.constant 0 : index
    %17 = vector.load %arg2[%c0_7, %c0_8] : memref<256x128xf32, #tpu.memory_space<vmem>>, vector<256x128xf32>
    %18 = vector.broadcast %13 : vector<1x128xf32> to vector<256x128xf32>
    %19 = arith.mulf %17, %18 : vector<256x128xf32>
    %20 = vector.broadcast %16 : vector<1x128xf32> to vector<256x128xf32>
    %21 = arith.addf %19, %20 : vector<256x128xf32>
    %cst_9 = arith.constant 0.000000e+00 : f32
    %22 = vector.broadcast %cst_9 : f32 to vector<256x128xf32>
    %23 = arith.maximumf %21, %22 : vector<256x128xf32>
    %24 = arith.truncf %23 : vector<256x128xf32> to vector<256x128xbf16>
    %c0_10 = arith.constant 0 : index
    %c0_11 = arith.constant 0 : index
    %25 = vector.load %arg6[%c0_10, %c0_11] : memref<256x128xbf16, #tpu.memory_space<vmem>>, vector<256x128xbf16>
    tpu.vector_store %arg6[%c0_10, %c0_11], %24 {strides = array<i32>} : memref<256x128xbf16, #tpu.memory_space<vmem>>, vector<256x128xbf16>,
    return
  }
  func.func @transform_0(%arg0: i32, %arg1: i32) -> (i32, i32) {
    %c0_i32 = arith.constant 0 : i32
    return %arg0, %arg1 : i32, i32
  }
  func.func @transform_1(%arg0: i32, %arg1: i32) -> (i32, i32) {
    %c0_i32 = arith.constant 0 : i32
    %c0_i32_0 = arith.constant 0 : i32
    return %c0_i32, %arg1 : i32, i32
  }
  func.func @transform_2(%arg0: i32, %arg1: i32) -> (i32, i32) {
    %c0_i32 = arith.constant 0 : i32
    %c0_i32_0 = arith.constant 0 : i32
    return %c0_i32, %arg1 : i32, i32
  }
  func.func @transform_3(%arg0: i32, %arg1: i32) -> (i32, i32) {
    %c0_i32 = arith.constant 0 : i32
    %c0_i32_0 = arith.constant 0 : i32
    return %c0_i32, %arg1 : i32, i32
  }
  func.func @transform_4(%arg0: i32, %arg1: i32) -> (i32, i32) {
    %c0_i32 = arith.constant 0 : i32
    return %arg0, %arg1 : i32, i32
  }
}

module attributes {stable_mosaic.version = 11 : i64} {
  func.func @_bn_relu_kernel(%arg0: i32, %arg1: i32, %arg2: memref<256x128xf32, #tpu.memory_space<vmem>>, %arg3: memref<2x128xf32, #tpu.memory_space<vmem>>, %arg4: memref<1x128xf32, #tpu.memory_space<vmem>>, %arg5: memref<1x128xf32, #tpu.memory_space<vmem>>, %arg6: memref<256x128xf32, #tpu.memory_space<vmem>>) attributes {dimension_semantics = [#tpu.dimension_semantics<parallel>, #tpu.dimension_semantics<parallel>], iteration_bounds = array<i64: 2, 1>, scalar_prefetch = 0 : i64, scratch_operands = 0 : i64, tpu.core_type = #tpu.core_type<tc>, window_params = [{transform_indices = @transform_0, window_bounds = array<i64: 256, 128>}, {transform_indices = @transform_1, window_bounds = array<i64: 2, 128>}, {transform_indices = @transform_2, window_bounds = array<i64: 1, 128>}, {transform_indices = @transform_3, window_bounds = array<i64: 1, 128>}, {transform_indices = @transform_4, window_bounds = array<i64: 256, 128>}]} {
    %c0 = arith.constant 0 : index
    %c0_0 = arith.constant 0 : index
    %0 = vector.load %arg3[%c0, %c0_0] : memref<2x128xf32, #tpu.memory_space<vmem>>, vector<2x128xf32>
    %1 = vector.extract_strided_slice %0 {offsets = [0, 0], sizes = [1, 128], strides = [1, 1]} : vector<2x128xf32> to vector<1x128xf32>
    %cst = arith.constant 0.001953125 : f32
    %2 = vector.broadcast %cst : f32 to vector<1x128xf32>
    %3 = arith.mulf %1, %2 : vector<1x128xf32>
    %4 = vector.extract_strided_slice %0 {offsets = [1, 0], sizes = [1, 128], strides = [1, 1]} : vector<2x128xf32> to vector<1x128xf32>
    %cst_1 = arith.constant 0.001953125 : f32
    %5 = vector.broadcast %cst_1 : f32 to vector<1x128xf32>
    %6 = arith.mulf %4, %5 : vector<1x128xf32>
    %7 = arith.mulf %3, %3 : vector<1x128xf32>
    %8 = arith.subf %6, %7 : vector<1x128xf32>
    %c0_2 = arith.constant 0 : index
    %c0_3 = arith.constant 0 : index
    %9 = vector.load %arg4[%c0_2, %c0_3] : memref<1x128xf32, #tpu.memory_space<vmem>>, vector<1x128xf32>
    %cst_4 = arith.constant 9.99999974E-6 : f32
    %10 = vector.broadcast %cst_4 : f32 to vector<1x128xf32>
    %11 = arith.addf %8, %10 : vector<1x128xf32>
    %12 = math.rsqrt %11 : vector<1x128xf32>
    %13 = arith.mulf %9, %12 : vector<1x128xf32>
    %c0_5 = arith.constant 0 : index
    %c0_6 = arith.constant 0 : index
    %14 = vector.load %arg5[%c0_5, %c0_6] : memref<1x128xf32, #tpu.memory_space<vmem>>, vector<1x128xf32>
    %15 = arith.mulf %3, %13 : vector<1x128xf32>
    %16 = arith.subf %14, %15 : vector<1x128xf32>
    %c0_7 = arith.constant 0 : index
    %c0_8 = arith.constant 0 : index
    %17 = vector.load %arg2[%c0_7, %c0_8] : memref<256x128xf32, #tpu.memory_space<vmem>>, vector<256x128xf32>
    %18 = vector.broadcast %13 : vector<1x128xf32> to vector<256x128xf32>
    %19 = arith.mulf %17, %18 : vector<256x128xf32>
    %20 = vector.broadcast %16 : vector<1x128xf32> to vector<256x128xf32>
    %21 = arith.addf %19, %20 : vector<256x128xf32>
    %cst_9 = arith.constant 0.000000e+00 : f32
    %22 = vector.broadcast %cst_9 : f32 to vector<256x128xf32>
    %23 = arith.maximumf %21, %22 : vector<256x128xf32>
    %c0_10 = arith.constant 0 : index
    %c0_11 = arith.constant 0 : index
    %24 = vector.load %arg6[%c0_10, %c0_11] : memref<256x128xf32, #tpu.memory_space<vmem>>, vector<256x128xf32>
    tpu.vector_store %arg6[%c0_10, %c0_11], %23 {strides = array<i32>} : memref<256x128xf32, #tpu.memory_space<vmem>>, vector<256x128xf32>,
    return
  }
  func.func @transform_0(%arg0: i32, %arg1: i32) -> (i32, i32) {
    %c0_i32 = arith.constant 0 : i32
    return %arg0, %arg1 : i32, i32
  }
  func.func @transform_1(%arg0: i32, %arg1: i32) -> (i32, i32) {
    %c0_i32 = arith.constant 0 : i32
    %c0_i32_0 = arith.constant 0 : i32
    return %c0_i32, %arg1 : i32, i32
  }
  func.func @transform_2(%arg0: i32, %arg1: i32) -> (i32, i32) {
    %c0_i32 = arith.constant 0 : i32
    %c0_i32_0 = arith.constant 0 : i32
    return %c0_i32, %arg1 : i32, i32
  }
  func.func @transform_3(%arg0: i32, %arg1: i32) -> (i32, i32) {
    %c0_i32 = arith.constant 0 : i32
    %c0_i32_0 = arith.constant 0 : i32
    return %c0_i32, %arg1 : i32, i32
  }
  func.func @transform_4(%arg0: i32, %arg1: i32) -> (i32, i32) {
    %c0_i32 = arith.constant 0 : i32
    return %arg0, %arg1 : i32, i32
  }
}

</mosaic_0001>

<llo_original>
// kernel: unet_base_conv_forward.5
$region0: #{unet_base_conv_forward.5}
  #allocation0 [shape = 'u32[]', space=smem, size = 0x4, offset = 0x4, fixed_abs, tag = 'smem constant byte address 0x4 - core index']
  #allocation1 [shape = 'u32[144,128]{1,0:T(1,128)}', space=vmem, size = 0x12000, scoped, tag = 'internal scratch']
  %s0 = inlined_call_operand.vmem [shape: f32[512,128], index: 0, kind: input, shape index: {}]
  %s1 = inlined_call_operand.vmem [shape: f32[2,128], index: 1, kind: input, shape index: {}]
  %s2 = inlined_call_operand.vmem [shape: f32[1,128], index: 2, kind: input, shape index: {}]
  %s3 = inlined_call_operand.vmem [shape: f32[1,128], index: 3, kind: input, shape index: {}]
  %s4 = inlined_call_operand.vmem [shape: bf16[512,128], index: 4, kind: output, shape index: {}]
  %s5 = sld [smem:[#allocation0]]
  $region49: #{unet_base_conv_forward.5} parent=0
    _
  %s7 = ssub.s32 1, %s5
  %s8 = scalar_select 0, %s7, %s5
  loop: start=0, step=1, limit=4
  $region2: #{unet_base_conv_forward.5} parent=0 // loop_pre_header
    _
  $region3: #{unet_base_conv_forward.5} parent=0 // loop_header
    %s10 = sphi 0, %s14
    %p11 = scmp.ge.s32.totalorder %s10, 4
    %s17 = sphi 0, %s29
    %s18 = sphi 0, %s25
    %s19 = sphi 0, %s17
    %s20 = sphi 0, %s18
    %s21 = sphi 0, %s19
    %s22 = sphi 0, %s20
    %s34 = sphi 0, %s36
    %s37 = sphi 0, %s34
    %s38 = sphi 0, %s37
    %s54 = sphi 0, %s38
    %s60 = sphi 0, %s62
    %s63 = sphi 0, %s60
    %s64 = sphi 0, %s63
    %s80 = sphi 0, %s64
    %s86 = sphi 0, %s88
    %s89 = sphi 0, %s86
    %s90 = sphi 0, %s89
    %s106 = sphi 0, %s90
    %s112 = sphi 0, %s114
    %s115 = sphi 0, %s112
    %s116 = sphi 0, %s115
    %s132 = sphi 0, %s116
    %s140 = sphi 0, %s142
    %s143 = sphi 0, %s140
    %s144 = sphi 0, %s143
    %s160 = sphi 0, %s144
  $region4: #{unet_base_conv_forward.5} parent=0 // loop_header_branch
    %13 = sbr.rel (%p11) target = $region8
  $region5: #{unet_base_conv_forward.5} parent=0 // loop_body
    %s15 = ssub.s32 %s10, 1
    %s16 = ssub.s32 %s10, 2
    %s23 = sadd.s32 1, %s18
    %p24 = scmp.ge.s32.totalorder %s23, 1
    %s25 = scalar_select %p24, 0, %s23
    %s26 = sadd.s32 1, %s17
    %s27 = scalar_select %p24, %s26, %s17
    %p28 = scmp.ge.s32.totalorder %s27, 2
    %s29 = scalar_select %p28, 0, %s27
    %s30 = ssub.s32 %s17, %s29
    %s31 = ssub.s32 %s18, %s25
    %s32 = sor.u32 %s30, %s31
    %p33 = scmp.eq.s32.totalorder %s32, 0
    %s35 = sadd.s32 %s34, 1
    %s36 = scalar_select %p33, %s34, %s35
    %p39 = pneg %p33
    %p40 = scmp.eq.s32.totalorder %s10, 1
    %p41 = por %p39, %p40
    %p42 = scmp.ne.s32.totalorder %s34, %s37
    %p43 = scmp.eq.s32.totalorder %s10, 0
    %p44 = por %p42, %p43
    %p45 = scmp.ne.s32.totalorder %s34, %s37
    %p46 = scmp.eq.s32.totalorder %s15, 1
    %p47 = por %p45, %p46
    %p48 = scmp.ne.s32.totalorder %s37, %s38
    %p49 = scmp.eq.s32.totalorder %s15, 0
    %p50 = por %p48, %p49
    %p51 = scmp.ne.s32.totalorder %s37, %s38
    %p52 = scmp.eq.s32.totalorder %s16, 1
    %p53 = por %p51, %p52
    %p55 = scmp.ne.s32.totalorder %s38, %s54
    %p56 = scmp.eq.s32.totalorder %s16, 0
    %p57 = por %p55, %p56
    %s58 = ssub.s32 %s18, %s25
    %p59 = scmp.eq.s32.totalorder %s58, 0
    %s61 = sadd.s32 %s60, 1
    %s62 = scalar_select %p59, %s60, %s61
    %p65 = pneg %p59
    %p66 = scmp.eq.s32.totalorder %s10, 1
    %p67 = por %p65, %p66
    %p68 = scmp.ne.s32.totalorder %s60, %s63
    %p69 = scmp.eq.s32.totalorder %s10, 0
    %p70 = por %p68, %p69
    %p71 = scmp.ne.s32.totalorder %s60, %s63
    %p72 = scmp.eq.s32.totalorder %s15, 1
    %p73 = por %p71, %p72
    %p74 = scmp.ne.s32.totalorder %s63, %s64
    %p75 = scmp.eq.s32.totalorder %s15, 0
    %p76 = por %p74, %p75
    %p77 = scmp.ne.s32.totalorder %s63, %s64
    %p78 = scmp.eq.s32.totalorder %s16, 1
    %p79 = por %p77, %p78
    %p81 = scmp.ne.s32.totalorder %s64, %s80
    %p82 = scmp.eq.s32.totalorder %s16, 0
    %p83 = por %p81, %p82
    %s84 = ssub.s32 %s18, %s25
    %p85 = scmp.eq.s32.totalorder %s84, 0
    %s87 = sadd.s32 %s86, 1
    %s88 = scalar_select %p85, %s86, %s87
    %p91 = pneg %p85
    %p92 = scmp.eq.s32.totalorder %s10, 1
    %p93 = por %p91, %p92
    %p94 = scmp.ne.s32.totalorder %s86, %s89
    %p95 = scmp.eq.s32.totalorder %s10, 0
    %p96 = por %p94, %p95
    %p97 = scmp.ne.s32.totalorder %s86, %s89
    %p98 = scmp.eq.s32.totalorder %s15, 1
    %p99 = por %p97, %p98
    %p100 = scmp.ne.s32.totalorder %s89, %s90
    %p101 = scmp.eq.s32.totalorder %s15, 0
    %p102 = por %p100, %p101
    %p103 = scmp.ne.s32.totalorder %s89, %s90
    %p104 = scmp.eq.s32.totalorder %s16, 1
    %p105 = por %p103, %p104
    %p107 = scmp.ne.s32.totalorder %s90, %s106
    %p108 = scmp.eq.s32.totalorder %s16, 0
    %p109 = por %p107, %p108
    %s110 = ssub.s32 %s18, %s25
    %p111 = scmp.eq.s32.totalorder %s110, 0
    %s113 = sadd.s32 %s112, 1
    %s114 = scalar_select %p111, %s112, %s113
    %p117 = pneg %p111
    %p118 = scmp.eq.s32.totalorder %s10, 1
    %p119 = por %p117, %p118
    %p120 = scmp.ne.s32.totalorder %s112, %s115
    %p121 = scmp.eq.s32.totalorder %s10, 0
    %p122 = por %p120, %p121
    %p123 = scmp.ne.s32.totalorder %s112, %s115
    %p124 = scmp.eq.s32.totalorder %s15, 1
    %p125 = por %p123, %p124
    %p126 = scmp.ne.s32.totalorder %s115, %s116
    %p127 = scmp.eq.s32.totalorder %s15, 0
    %p128 = por %p126, %p127
    %p129 = scmp.ne.s32.totalorder %s115, %s116
    %p130 = scmp.eq.s32.totalorder %s16, 1
    %p131 = por %p129, %p130
    %p133 = scmp.ne.s32.totalorder %s116, %s132
    %p134 = scmp.eq.s32.totalorder %s16, 0
    %p135 = por %p133, %p134
    %s136 = ssub.s32 %s17, %s29
    %s137 = ssub.s32 %s18, %s25
    %s138 = sor.u32 %s136, %s137
    %p139 = scmp.eq.s32.totalorder %s138, 0
    %s141 = sadd.s32 %s140, 1
    %s142 = scalar_select %p139, %s140, %s141
    %p145 = pneg %p139
    %p146 = scmp.eq.s32.totalorder %s10, 1
    %p147 = por %p145, %p146
    %p148 = scmp.ne.s32.totalorder %s140, %s143
    %p149 = scmp.eq.s32.totalorder %s10, 0
    %p150 = por %p148, %p149
    %p151 = scmp.ne.s32.totalorder %s140, %s143
    %p152 = scmp.eq.s32.totalorder %s15, 1
    %p153 = por %p151, %p152
    %p154 = scmp.ne.s32.totalorder %s143, %s144
    %p155 = scmp.eq.s32.totalorder %s15, 0
    %p156 = por %p154, %p155
    %p157 = scmp.ne.s32.totalorder %s143, %s144
    %p158 = scmp.eq.s32.totalorder %s16, 1
    %p159 = por %p157, %p158
    %p161 = scmp.ne.s32.totalorder %s144, %s160
    %p162 = scmp.eq.s32.totalorder %s16, 0
    %p163 = por %p161, %p162
    %p164 = scmp.le.s32.totalorder 1, %s10
    %p165 = scmp.lt.s32.totalorder %s10, 3
    %p166 = pnand %p164, %p165
    %p167 = pneg %p166
    // Predicated region
    $region9: #{unet_base_conv_forward.5} parent=5 // pred_check
      _
    $region10: #{unet_base_conv_forward.5} parent=5 // pred_check_branch
      %169 = sbr.rel (%p166) target = $region12
    $region11: #{unet_base_conv_forward.5} parent=5 // pred_region
      %s170 = ssub.s32 %s10, 1
      // Predicated region
      $region13: #{unet_base_conv_forward.5} parent=11 // pred_check
        %p171 = pneg %p76
      $region14: #{unet_base_conv_forward.5} parent=11 // pred_check_branch
        %173 = sbr.rel (%p171) target = $region16
      $region15: #{unet_base_conv_forward.5} parent=11 // pred_region
        %p174 = scmp.lt.s32.totalorder %s20, 0
        %s175 = scalar_select %p174, %s20, 0
        %s176 = smul.addr %s175, 2
        %s177 = scalar_lea.vmem %s1, %s176
      $region16: #{unet_base_conv_forward.5} parent=11 // pred_fallthru
        _
      // Predicated region
      $region17: #{unet_base_conv_forward.5} parent=11 // pred_check
        %p178 = pneg %p102
      $region18: #{unet_base_conv_forward.5} parent=11 // pred_check_branch
        %180 = sbr.rel (%p178) target = $region20
      $region19: #{unet_base_conv_forward.5} parent=11 // pred_region
        %p181 = scmp.lt.s32.totalorder %s20, 0
        %s182 = scalar_select %p181, %s20, 0
        %s183 = scalar_lea.vmem %s2, %s182
      $region20: #{unet_base_conv_forward.5} parent=11 // pred_fallthru
        _
      // Predicated region
      $region21: #{unet_base_conv_forward.5} parent=11 // pred_check
        %p184 = pneg %p128
      $region22: #{unet_base_conv_forward.5} parent=11 // pred_check_branch
        %186 = sbr.rel (%p184) target = $region24
      $region23: #{unet_base_conv_forward.5} parent=11 // pred_region
        %p187 = scmp.lt.s32.totalorder %s20, 0
        %s188 = scalar_select %p187, %s20, 0
        %s189 = scalar_lea.vmem %s3, %s188
      $region24: #{unet_base_conv_forward.5} parent=11 // pred_fallthru
        _
    $region12: #{unet_base_conv_forward.5} parent=5 // pred_fallthru
      _
    %p190 = scmp.lt.s32.totalorder %s10, 2
    // Predicated region
    $region25: #{unet_base_conv_forward.5} parent=5 // pred_check
      %p191 = pneg %p190
    $region26: #{unet_base_conv_forward.5} parent=5 // pred_check_branch
      %193 = sbr.rel (%p191) target = $region28
    $region27: #{unet_base_conv_forward.5} parent=5 // pred_region
      // Predicated region
      $region29: #{unet_base_conv_forward.5} parent=27 // pred_check
        %p194 = pneg %p44
      $region30: #{unet_base_conv_forward.5} parent=27 // pred_check_branch
        %196 = sbr.rel (%p194) target = $region32
      $region31: #{unet_base_conv_forward.5} parent=27 // pred_region
        %s197 = smul.u32 32, %s17
        %p198 = scmp.lt.s32.totalorder %s197, 63
        %s199 = scalar_select %p198, %s197, 63
        %p200 = scmp.lt.s32.totalorder %s18, 0
        %s201 = scalar_select %p200, %s18, 0
        %s202 = sadd.s32 %s201, %s199
        %s203 = smul.addr %s202, 8
        %s204 = scalar_lea.vmem %s0, %s203
        %s205 = smul.u32 32, %s17
      $region32: #{unet_base_conv_forward.5} parent=27 // pred_fallthru
        _
    $region28: #{unet_base_conv_forward.5} parent=5 // pred_fallthru
      _
    %p206 = scmp.le.s32.totalorder 1, %s10
    %p207 = scmp.lt.s32.totalorder %s10, 3
    %p208 = pnand %p206, %p207
    %p209 = pneg %p208
    // Predicated region
    $region33: #{unet_base_conv_forward.5} parent=5 // pred_check
      _
    $region34: #{unet_base_conv_forward.5} parent=5 // pred_check_branch
      %211 = sbr.rel (%p208) target = $region36
    $region35: #{unet_base_conv_forward.5} parent=5 // pred_region
      %s212 = ssub.s32 %s10, 1
      %s213 = smul.u32 32, %s19
      %p214 = scmp.lt.s32.totalorder %s213, 63
      %s215 = scalar_select %p214, %s213, 63
      %p216 = scmp.lt.s32.totalorder %s20, 0
      %s217 = scalar_select %p216, %s20, 0
      %s218 = sadd.s32 %s217, %s215
      %s219 = smul.addr %s218, 8
      %s220 = scalar_lea.vmem %s0, %s219
      %p221 = pneg %p50
      %p222 = pneg %p47
      %p223 = scmp.lt.s32.totalorder %s20, 0
      %s224 = scalar_select %p223, %s20, 0
      %s225 = smul.addr %s224, 2
      %s226 = scalar_lea.vmem %s1, %s225
      %p227 = pneg %p76
      %p228 = pneg %p73
      %p229 = scmp.lt.s32.totalorder %s20, 0
      %s230 = scalar_select %p229, %s20, 0
      %s231 = scalar_lea.vmem %s2, %s230
      %p232 = pneg %p102
      %p233 = pneg %p99
      %p234 = scmp.lt.s32.totalorder %s20, 0
      %s235 = scalar_select %p234, %s20, 0
      %s236 = scalar_lea.vmem %s3, %s235
      %p237 = pneg %p128
      %p238 = pneg %p125
      %p239 = pneg %p156
      %p240 = pneg %p153
      %s241 = smul.u32 32, %s19
      %p242 = scmp.lt.s32.totalorder %s241, 63
      %s243 = scalar_select %p242, %s241, 63
      %p244 = scmp.lt.s32.totalorder %s20, 0
      %s245 = scalar_select %p244, %s20, 0
      %s246 = sadd.s32 %s245, %s243
      %s247 = smul.addr %s246, 4
      %s248 = scalar_lea.vmem %s4, %s247
      %s249 = smul.u32 32, %s19
      %p250 = scmp.lt.s32.totalorder %s249, 63
      %s251 = scalar_select %p250, %s249, 63
      %p252 = scmp.lt.s32.totalorder %s20, 0
      %s253 = scalar_select %p252, %s20, 0
      %s254 = sadd.s32 %s253, %s251
      %s255 = smul.addr %s254, 8
      %s256 = scalar_lea.vmem %s0, %s255
      %s257 = smul.u32 32, %s19
      %p258 = scmp.lt.s32.totalorder %s20, 0
      %s259 = scalar_select %p258, %s20, 0
      %s260 = smul.addr %s259, 2
      %s261 = scalar_lea.vmem %s1, %s260
      %p262 = scmp.lt.s32.totalorder %s20, 0
      %s263 = scalar_select %p262, %s20, 0
      %s264 = scalar_lea.vmem %s2, %s263
      %p265 = scmp.lt.s32.totalorder %s20, 0
      %s266 = scalar_select %p265, %s20, 0
      %s267 = scalar_lea.vmem %s3, %s266
      %s268 = smul.u32 32, %s19
      %p269 = scmp.lt.s32.totalorder %s268, 63
      %s270 = scalar_select %p269, %s268, 63
      %p271 = scmp.lt.s32.totalorder %s20, 0
      %s272 = scalar_select %p271, %s20, 0
      %s273 = sadd.s32 %s272, %s270
      %s274 = smul.addr %s273, 4
      %s275 = scalar_lea.vmem %s4, %s274
      %s276 = smul.u32 32, %s19
      %v277 = vld [vmem:[%s261] sm:$0x3]
      %v278 = vmul.f32 %v277, 0.001953125
      %v279 = vmul.f32 %v278, %v278
      %v281 = vrot.slane %v279, 7
      %v283 = vsub.f32 %v278, %v281
      %v284 = vld [vmem:[%s264] sm:$0x1]
      %v285 = vadd.f32 %v283, 1e-05
      %v286 = vrsqrt.pop %v285
      %v289 = vunpack.c.l.s4 1966171168
      %v290 = vunpack.c.0.s8 %v289
      %v291 = vlaneseq
      %v292 = vshrl.u32 %v291, 7
      %v293 = vsub.s32 %v290, %v292
      %v294 = vrot.slane %v286, %v293
      %v295 = vcombine.high %v294, %v294
      %v297 = vunpack.c.l.s4 1966171168
      %v298 = vunpack.c.0.s8 %v297
      %v299 = vlaneseq
      %v300 = vshrl.u32 %v299, 7
      %v301 = vsub.s32 %v298, %v300
      %v302 = vrot.slane %v295, %v301
      %v304 = vmul.f32 %v284, %v302
      %v305 = vld [vmem:[%s267] sm:$0x1]
      %v306 = vmul.f32 %v278, %v304
      %v307 = vsub.f32 %v305, %v306
      %v308 = vld [vmem:[%s256] sm:$0xff]
      %v309 = vld [vmem:[%s256 + $0x8] sm:$0xff]
      %v310 = vld [vmem:[%s256 + $0x10] sm:$0xff]
      %v311 = vld [vmem:[%s256 + $0x18] sm:$0xff]
      %v312 = vld [vmem:[%s256 + $0x20] sm:$0xff]
      %v313 = vld [vmem:[%s256 + $0x28] sm:$0xff]
      %v314 = vld [vmem:[%s256 + $0x30] sm:$0xff]
      %v315 = vld [vmem:[%s256 + $0x38] sm:$0xff]
      %v316 = vld [vmem:[%s256 + $0x40] sm:$0xff]
      %v317 = vld [vmem:[%s256 + $0x48] sm:$0xff]
      %v318 = vld [vmem:[%s256 + $0x50] sm:$0xff]
      %v319 = vld [vmem:[%s256 + $0x58] sm:$0xff]
      %v320 = vld [vmem:[%s256 + $0x60] sm:$0xff]
      %v321 = vld [vmem:[%s256 + $0x68] sm:$0xff]
      %v322 = vld [vmem:[%s256 + $0x70] sm:$0xff]
      %v323 = vld [vmem:[%s256 + $0x78] sm:$0xff]
      %v324 = vld [vmem:[%s256 + $0x80] sm:$0xff]
      %v325 = vld [vmem:[%s256 + $0x88] sm:$0xff]
      %v326 = vld [vmem:[%s256 + $0x90] sm:$0xff]
      %v327 = vld [vmem:[%s256 + $0x98] sm:$0xff]
      %v328 = vld [vmem:[%s256 + $0xa0] sm:$0xff]
      %v329 = vld [vmem:[%s256 + $0xa8] sm:$0xff]
      %v330 = vld [vmem:[%s256 + $0xb0] sm:$0xff]
      %v331 = vld [vmem:[%s256 + $0xb8] sm:$0xff]
      %v332 = vld [vmem:[%s256 + $0xc0] sm:$0xff]
      %v333 = vld [vmem:[%s256 + $0xc8] sm:$0xff]
      %v334 = vld [vmem:[%s256 + $0xd0] sm:$0xff]
      %v335 = vld [vmem:[%s256 + $0xd8] sm:$0xff]
      %v336 = vld [vmem:[%s256 + $0xe0] sm:$0xff]
      %v337 = vld [vmem:[%s256 + $0xe8] sm:$0xff]
      %v338 = vld [vmem:[%s256 + $0xf0] sm:$0xff]
      %v339 = vld [vmem:[%s256 + $0xf8] sm:$0xff]
      %v341 = vlaneseq
      %v342 = vshrl.u32 %v341, 7
      %v343 = vsub.s32 0, %v342
      %v344 = vrot.slane %v304, %v343
      %v346 = vmul.f32 %v308, %v344
      %v347 = vmul.f32 %v309, %v344
      %v348 = vmul.f32 %v310, %v344
      %v349 = vmul.f32 %v311, %v344
      %v350 = vmul.f32 %v312, %v344
      %v351 = vmul.f32 %v313, %v344
      %v352 = vmul.f32 %v314, %v344
      %v353 = vmul.f32 %v315, %v344
      %v354 = vmul.f32 %v316, %v344
      %v355 = vmul.f32 %v317, %v344
      %v356 = vmul.f32 %v318, %v344
      %v357 = vmul.f32 %v319, %v344
      %v358 = vmul.f32 %v320, %v344
      %v359 = vmul.f32 %v321, %v344
      %v360 = vmul.f32 %v322, %v344
      %v361 = vmul.f32 %v323, %v344
      %v362 = vmul.f32 %v324, %v344
      %v363 = vmul.f32 %v325, %v344
      %v364 = vmul.f32 %v326, %v344
      %v365 = vmul.f32 %v327, %v344
      %v366 = vmul.f32 %v328, %v344
      %v367 = vmul.f32 %v329, %v344
      %v368 = vmul.f32 %v330, %v344
      %v369 = vmul.f32 %v331, %v344
      %v370 = vmul.f32 %v332, %v344
      %v371 = vmul.f32 %v333, %v344
      %v372 = vmul.f32 %v334, %v344
      %v373 = vmul.f32 %v335, %v344
      %v374 = vmul.f32 %v336, %v344
      %v375 = vmul.f32 %v337, %v344
      %v376 = vmul.f32 %v338, %v344
      %v377 = vmul.f32 %v339, %v344
      %v379 = vlaneseq
      %v380 = vshrl.u32 %v379, 7
      %v381 = vsub.s32 0, %v380
      %v382 = vrot.slane %v307, %v381
      %v384 = vadd.f32 %v346, %v382
      %v385 = vadd.f32 %v347, %v382
      %v386 = vadd.f32 %v348, %v382
      %v387 = vadd.f32 %v349, %v382
      %v388 = vadd.f32 %v350, %v382
      %v389 = vadd.f32 %v351, %v382
      %v390 = vadd.f32 %v352, %v382
      %v391 = vadd.f32 %v353, %v382
      %v392 = vadd.f32 %v354, %v382
      %v393 = vadd.f32 %v355, %v382
      %v394 = vadd.f32 %v356, %v382
      %v395 = vadd.f32 %v357, %v382
      %v396 = vadd.f32 %v358, %v382
      %v397 = vadd.f32 %v359, %v382
      %v398 = vadd.f32 %v360, %v382
      %v399 = vadd.f32 %v361, %v382
      %v400 = vadd.f32 %v362, %v382
      %v401 = vadd.f32 %v363, %v382
      %v402 = vadd.f32 %v364, %v382
      %v403 = vadd.f32 %v365, %v382
      %v404 = vadd.f32 %v366, %v382
      %v405 = vadd.f32 %v367, %v382
      %v406 = vadd.f32 %v368, %v382
      %v407 = vadd.f32 %v369, %v382
      %v408 = vadd.f32 %v370, %v382
      %v409 = vadd.f32 %v371, %v382
      %v410 = vadd.f32 %v372, %v382
      %v411 = vadd.f32 %v373, %v382
      %v412 = vadd.f32 %v374, %v382
      %v413 = vadd.f32 %v375, %v382
      %v414 = vadd.f32 %v376, %v382
      %v415 = vadd.f32 %v377, %v382
      %v416 = vmax.f32 %v384, 0.0
      %v417 = vmax.f32 %v385, 0.0
      %v418 = vmax.f32 %v386, 0.0
      %v419 = vmax.f32 %v387, 0.0
      %v420 = vmax.f32 %v388, 0.0
      %v421 = vmax.f32 %v389, 0.0
      %v422 = vmax.f32 %v390, 0.0
      %v423 = vmax.f32 %v391, 0.0
      %v424 = vmax.f32 %v392, 0.0
      %v425 = vmax.f32 %v393, 0.0
      %v426 = vmax.f32 %v394, 0.0
      %v427 = vmax.f32 %v395, 0.0
      %v428 = vmax.f32 %v396, 0.0
      %v429 = vmax.f32 %v397, 0.0
      %v430 = vmax.f32 %v398, 0.0
      %v431 = vmax.f32 %v399, 0.0
      %v432 = vmax.f32 %v400, 0.0
      %v433 = vmax.f32 %v401, 0.0
      %v434 = vmax.f32 %v402, 0.0
      %v435 = vmax.f32 %v403, 0.0
      %v436 = vmax.f32 %v404, 0.0
      %v437 = vmax.f32 %v405, 0.0
      %v438 = vmax.f32 %v406, 0.0
      %v439 = vmax.f32 %v407, 0.0
      %v440 = vmax.f32 %v408, 0.0
      %v441 = vmax.f32 %v409, 0.0
      %v442 = vmax.f32 %v410, 0.0
      %v443 = vmax.f32 %v411, 0.0
      %v444 = vmax.f32 %v412, 0.0
      %v445 = vmax.f32 %v413, 0.0
      %v446 = vmax.f32 %v414, 0.0
      %v447 = vmax.f32 %v415, 0.0
      %v448 = vpack.c.bf16 %v417, %v416
      %v449 = vpack.c.bf16 %v419, %v418
      %v450 = vpack.c.bf16 %v421, %v420
      %v451 = vpack.c.bf16 %v423, %v422
      %v452 = vpack.c.bf16 %v425, %v424
      %v453 = vpack.c.bf16 %v427, %v426
      %v454 = vpack.c.bf16 %v429, %v428
      %v455 = vpack.c.bf16 %v431, %v430
      %v456 = vpack.c.bf16 %v433, %v432
      %v457 = vpack.c.bf16 %v435, %v434
      %v458 = vpack.c.bf16 %v437, %v436
      %v459 = vpack.c.bf16 %v439, %v438
      %v460 = vpack.c.bf16 %v441, %v440
      %v461 = vpack.c.bf16 %v443, %v442
      %v462 = vpack.c.bf16 %v445, %v444
      %v463 = vpack.c.bf16 %v447, %v446
      %v480 = vunpack.c.l.b16 %v448
      %v481 = vunpack.c.h.b16 %v448
      %v482 = vunpack.c.l.b16 %v449
      %v483 = vunpack.c.h.b16 %v449
      %v484 = vunpack.c.l.b16 %v450
      %v485 = vunpack.c.h.b16 %v450
      %v486 = vunpack.c.l.b16 %v451
      %v487 = vunpack.c.h.b16 %v451
      %v488 = vunpack.c.l.b16 %v452
      %v489 = vunpack.c.h.b16 %v452
      %v490 = vunpack.c.l.b16 %v453
      %v491 = vunpack.c.h.b16 %v453
      %v492 = vunpack.c.l.b16 %v454
      %v493 = vunpack.c.h.b16 %v454
      %v494 = vunpack.c.l.b16 %v455
      %v495 = vunpack.c.h.b16 %v455
      %v496 = vunpack.c.l.b16 %v456
      %v497 = vunpack.c.h.b16 %v456
      %v498 = vunpack.c.l.b16 %v457
      %v499 = vunpack.c.h.b16 %v457
      %v500 = vunpack.c.l.b16 %v458
      %v501 = vunpack.c.h.b16 %v458
      %v502 = vunpack.c.l.b16 %v459
      %v503 = vunpack.c.h.b16 %v459
      %v504 = vunpack.c.l.b16 %v460
      %v505 = vunpack.c.h.b16 %v460
      %v506 = vunpack.c.l.b16 %v461
      %v507 = vunpack.c.h.b16 %v461
      %v508 = vunpack.c.l.b16 %v462
      %v509 = vunpack.c.h.b16 %v462
      %v510 = vunpack.c.l.b16 %v463
      %v511 = vunpack.c.h.b16 %v463
      %v512 = vpack.c.b16 %v480, %v480
      %v513 = vpack.c.b16 %v481, %v481
      %v514 = vpack.c.b16 %v482, %v482
      %v515 = vpack.c.b16 %v483, %v483
      %v516 = vpack.c.b16 %v484, %v484
      %v517 = vpack.c.b16 %v485, %v485
      %v518 = vpack.c.b16 %v486, %v486
      %v519 = vpack.c.b16 %v487, %v487
      %v520 = vpack.c.b16 %v488, %v488
      %v521 = vpack.c.b16 %v489, %v489
      %v522 = vpack.c.b16 %v490, %v490
      %v523 = vpack.c.b16 %v491, %v491
      %v524 = vpack.c.b16 %v492, %v492
      %v525 = vpack.c.b16 %v493, %v493
      %v526 = vpack.c.b16 %v494, %v494
      %v527 = vpack.c.b16 %v495, %v495
      %v528 = vpack.c.b16 %v496, %v496
      %v529 = vpack.c.b16 %v497, %v497
      %v530 = vpack.c.b16 %v498, %v498
      %v531 = vpack.c.b16 %v499, %v499
      %v532 = vpack.c.b16 %v500, %v500
      %v533 = vpack.c.b16 %v501, %v501
      %v534 = vpack.c.b16 %v502, %v502
      %v535 = vpack.c.b16 %v503, %v503
      %v536 = vpack.c.b16 %v504, %v504
      %v537 = vpack.c.b16 %v505, %v505
      %v538 = vpack.c.b16 %v506, %v506
      %v539 = vpack.c.b16 %v507, %v507
      %v540 = vpack.c.b16 %v508, %v508
      %v541 = vpack.c.b16 %v509, %v509
      %v542 = vpack.c.b16 %v510, %v510
      %v543 = vpack.c.b16 %v511, %v511
      %576 = vst [vmem:[%s275] sm:$0xf] %v512
      %577 = vst [vmem:[%s275 + $0x4] sm:$0xf] %v513
      %578 = vst [vmem:[%s275 + $0x8] sm:$0xf] %v514
      %579 = vst [vmem:[%s275 + $0xc] sm:$0xf] %v515
      %580 = vst [vmem:[%s275 + $0x10] sm:$0xf] %v516
      %581 = vst [vmem:[%s275 + $0x14] sm:$0xf] %v517
      %582 = vst [vmem:[%s275 + $0x18] sm:$0xf] %v518
      %583 = vst [vmem:[%s275 + $0x1c] sm:$0xf] %v519
      %584 = vst [vmem:[%s275 + $0x20] sm:$0xf] %v520
      %585 = vst [vmem:[%s275 + $0x24] sm:$0xf] %v521
      %586 = vst [vmem:[%s275 + $0x28] sm:$0xf] %v522
      %587 = vst [vmem:[%s275 + $0x2c] sm:$0xf] %v523
      %588 = vst [vmem:[%s275 + $0x30] sm:$0xf] %v524
      %589 = vst [vmem:[%s275 + $0x34] sm:$0xf] %v525
      %590 = vst [vmem:[%s275 + $0x38] sm:$0xf] %v526
      %591 = vst [vmem:[%s275 + $0x3c] sm:$0xf] %v527
      %592 = vst [vmem:[%s275 + $0x40] sm:$0xf] %v528
      %593 = vst [vmem:[%s275 + $0x44] sm:$0xf] %v529
      %594 = vst [vmem:[%s275 + $0x48] sm:$0xf] %v530
      %595 = vst [vmem:[%s275 + $0x4c] sm:$0xf] %v531
      %596 = vst [vmem:[%s275 + $0x50] sm:$0xf] %v532
      %597 = vst [vmem:[%s275 + $0x54] sm:$0xf] %v533
      %598 = vst [vmem:[%s275 + $0x58] sm:$0xf] %v534
      %599 = vst [vmem:[%s275 + $0x5c] sm:$0xf] %v535
      %600 = vst [vmem:[%s275 + $0x60] sm:$0xf] %v536
      %601 = vst [vmem:[%s275 + $0x64] sm:$0xf] %v537
      %602 = vst [vmem:[%s275 + $0x68] sm:$0xf] %v538
      %603 = vst [vmem:[%s275 + $0x6c] sm:$0xf] %v539
      %604 = vst [vmem:[%s275 + $0x70] sm:$0xf] %v540
      %605 = vst [vmem:[%s275 + $0x74] sm:$0xf] %v541
      %606 = vst [vmem:[%s275 + $0x78] sm:$0xf] %v542
      %607 = vst [vmem:[%s275 + $0x7c] sm:$0xf] %v543
      %s608 = smul.u32 32, %s19
      %p609 = scmp.lt.s32.totalorder %s608, 63
      %s610 = scalar_select %p609, %s608, 63
      %p611 = scmp.lt.s32.totalorder %s20, 0
      %s612 = scalar_select %p611, %s20, 0
      %s613 = sadd.s32 %s612, %s610
      %s614 = smul.addr %s613, 4
      %s615 = scalar_lea.vmem %s4, %s614
      // Predicated region
      $region37: #{unet_base_conv_forward.5} parent=35 // pred_check
        %p616 = pneg %p153
      $region38: #{unet_base_conv_forward.5} parent=35 // pred_check_branch
        %618 = sbr.rel (%p616) target = $region40
      $region39: #{unet_base_conv_forward.5} parent=35 // pred_region
        %s619 = smul.u32 32, %s19
      $region40: #{unet_base_conv_forward.5} parent=35 // pred_fallthru
        _
    $region36: #{unet_base_conv_forward.5} parent=5 // pred_fallthru
      _
    %p620 = scmp.le.s32.totalorder 2, %s10
    // Predicated region
    $region41: #{unet_base_conv_forward.5} parent=5 // pred_check
      %p621 = pneg %p620
    $region42: #{unet_base_conv_forward.5} parent=5 // pred_check_branch
      %623 = sbr.rel (%p621) target = $region44
    $region43: #{unet_base_conv_forward.5} parent=5 // pred_region
      %s624 = ssub.s32 %s10, 2
      // Predicated region
      $region45: #{unet_base_conv_forward.5} parent=43 // pred_check
        %p625 = pneg %p159
      $region46: #{unet_base_conv_forward.5} parent=43 // pred_check_branch
        %627 = sbr.rel (%p625) target = $region48
      $region47: #{unet_base_conv_forward.5} parent=43 // pred_region
        %s628 = smul.u32 32, %s21
        %p629 = scmp.lt.s32.totalorder %s628, 63
        %s630 = scalar_select %p629, %s628, 63
        %p631 = scmp.lt.s32.totalorder %s22, 0
        %s632 = scalar_select %p631, %s22, 0
        %s633 = sadd.s32 %s632, %s630
        %s634 = smul.addr %s633, 4
        %s635 = scalar_lea.vmem %s4, %s634
      $region48: #{unet_base_conv_forward.5} parent=43 // pred_fallthru
        _
    $region44: #{unet_base_conv_forward.5} parent=5 // pred_fallthru
      _
  $region6: #{unet_base_conv_forward.5} parent=0 // loop_footer
    %s14 = sadd.s32 1, %s10
  $region7: #{unet_base_conv_forward.5} parent=0 // loop_footer_branch
    %9 = sbr.rel target = $region3
  $region8: #{unet_base_conv_forward.5} parent=0 // loop_exit
    _

// kernel: unet_base_conv_forward.4
$region0: #{unet_base_conv_forward.4}
  #allocation0 [shape = 'u32[]', space=smem, size = 0x4, offset = 0x4, fixed_abs, tag = 'smem constant byte address 0x4 - core index']
  #allocation1 [shape = 'u32[144,128]{1,0:T(1,128)}', space=vmem, size = 0x12000, scoped, tag = 'internal scratch']
  #allocation2 [shape = 'f32[256,128]{1,0:T(8,128)}', space=vmem, size = 0x20000, scoped, tag = 'scratch operand']
  %s0 = inlined_call_operand.vmem [shape: bf16[512,128], index: 0, kind: input, shape index: {}]
  %s1 = inlined_call_operand.vmem [shape: bf16[128,128], index: 1, kind: input, shape index: {}]
  %s2 = inlined_call_operand.vmem [shape: f32[1,128], index: 2, kind: input, shape index: {}]
  %s3 = inlined_call_operand.vmem [shape: f32[512,128], index: 3, kind: output, shape index: {0}]
  %s4 = inlined_call_operand.vmem [shape: f32[2,128], index: 4, kind: output, shape index: {1}]
  %5 = xla_tuple %s3, %s4
  %s6 = sld [smem:[#allocation0]]
  $region65: #{unet_base_conv_forward.4} parent=0
    _
  %s8 = ssub.s32 1, %s6
  %s9 = scalar_select 0, %s8, %s6
  loop: start=0, step=1, limit=4
  $region2: #{unet_base_conv_forward.4} parent=0 // loop_pre_header
    _
  $region3: #{unet_base_conv_forward.4} parent=0 // loop_header
    %s11 = sphi 0, %s15
    %p12 = scmp.ge.s32.totalorder %s11, 4
    %s18 = sphi 0, %s37
    %s19 = sphi 0, %s33
    %s20 = sphi 0, %s29
    %s21 = sphi 0, %s18
    %s22 = sphi 0, %s19
    %s23 = sphi 0, %s20
    %s24 = sphi 0, %s21
    %s25 = sphi 0, %s22
    %s26 = sphi 0, %s23
    %s42 = sphi 0, %s44
    %s45 = sphi 0, %s42
    %s46 = sphi 0, %s45
    %s62 = sphi 0, %s46
    %s70 = sphi 0, %s72
    %s73 = sphi 0, %s70
    %s74 = sphi 0, %s73
    %s90 = sphi 0, %s74
    %s96 = sphi 0, %s98
    %s99 = sphi 0, %s96
    %s100 = sphi 0, %s99
    %s116 = sphi 0, %s100
    %s124 = sphi 0, %s126
    %s127 = sphi 0, %s124
    %s128 = sphi 0, %s127
    %s144 = sphi 0, %s128
    %s150 = sphi 0, %s152
    %s153 = sphi 0, %s150
    %s154 = sphi 0, %s153
    %s170 = sphi 0, %s154
  $region4: #{unet_base_conv_forward.4} parent=0 // loop_header_branch
    %14 = sbr.rel (%p12) target = $region8
  $region5: #{unet_base_conv_forward.4} parent=0 // loop_body
    %s16 = ssub.s32 %s11, 1
    %s17 = ssub.s32 %s11, 2
    %s27 = sadd.s32 1, %s20
    %p28 = scmp.ge.s32.totalorder %s27, 1
    %s29 = scalar_select %p28, 0, %s27
    %s30 = sadd.s32 1, %s19
    %s31 = scalar_select %p28, %s30, %s19
    %p32 = scmp.ge.s32.totalorder %s31, 2
    %s33 = scalar_select %p32, 0, %s31
    %s34 = sadd.s32 1, %s18
    %s35 = scalar_select %p32, %s34, %s18
    %p36 = scmp.ge.s32.totalorder %s35, 1
    %s37 = scalar_select %p36, 0, %s35
    %s38 = ssub.s32 %s19, %s33
    %s39 = ssub.s32 %s20, %s29
    %s40 = sor.u32 %s38, %s39
    %p41 = scmp.eq.s32.totalorder %s40, 0
    %s43 = sadd.s32 %s42, 1
    %s44 = scalar_select %p41, %s42, %s43
    %p47 = pneg %p41
    %p48 = scmp.eq.s32.totalorder %s11, 1
    %p49 = por %p47, %p48
    %p50 = scmp.ne.s32.totalorder %s42, %s45
    %p51 = scmp.eq.s32.totalorder %s11, 0
    %p52 = por %p50, %p51
    %p53 = scmp.ne.s32.totalorder %s42, %s45
    %p54 = scmp.eq.s32.totalorder %s16, 1
    %p55 = por %p53, %p54
    %p56 = scmp.ne.s32.totalorder %s45, %s46
    %p57 = scmp.eq.s32.totalorder %s16, 0
    %p58 = por %p56, %p57
    %p59 = scmp.ne.s32.totalorder %s45, %s46
    %p60 = scmp.eq.s32.totalorder %s17, 1
    %p61 = por %p59, %p60
    %p63 = scmp.ne.s32.totalorder %s46, %s62
    %p64 = scmp.eq.s32.totalorder %s17, 0
    %p65 = por %p63, %p64
    %s66 = ssub.s32 %s20, %s29
    %s67 = ssub.s32 %s18, %s37
    %s68 = sor.u32 %s66, %s67
    %p69 = scmp.eq.s32.totalorder %s68, 0
    %s71 = sadd.s32 %s70, 1
    %s72 = scalar_select %p69, %s70, %s71
    %p75 = pneg %p69
    %p76 = scmp.eq.s32.totalorder %s11, 1
    %p77 = por %p75, %p76
    %p78 = scmp.ne.s32.totalorder %s70, %s73
    %p79 = scmp.eq.s32.totalorder %s11, 0
    %p80 = por %p78, %p79
    %p81 = scmp.ne.s32.totalorder %s70, %s73
    %p82 = scmp.eq.s32.totalorder %s16, 1
    %p83 = por %p81, %p82
    %p84 = scmp.ne.s32.totalorder %s73, %s74
    %p85 = scmp.eq.s32.totalorder %s16, 0
    %p86 = por %p84, %p85
    %p87 = scmp.ne.s32.totalorder %s73, %s74
    %p88 = scmp.eq.s32.totalorder %s17, 1
    %p89 = por %p87, %p88
    %p91 = scmp.ne.s32.totalorder %s74, %s90
    %p92 = scmp.eq.s32.totalorder %s17, 0
    %p93 = por %p91, %p92
    %s94 = ssub.s32 %s18, %s37
    %p95 = scmp.eq.s32.totalorder %s94, 0
    %s97 = sadd.s32 %s96, 1
    %s98 = scalar_select %p95, %s96, %s97
    %p101 = pneg %p95
    %p102 = scmp.eq.s32.totalorder %s11, 1
    %p103 = por %p101, %p102
    %p104 = scmp.ne.s32.totalorder %s96, %s99
    %p105 = scmp.eq.s32.totalorder %s11, 0
    %p106 = por %p104, %p105
    %p107 = scmp.ne.s32.totalorder %s96, %s99
    %p108 = scmp.eq.s32.totalorder %s16, 1
    %p109 = por %p107, %p108
    %p110 = scmp.ne.s32.totalorder %s99, %s100
    %p111 = scmp.eq.s32.totalorder %s16, 0
    %p112 = por %p110, %p111
    %p113 = scmp.ne.s32.totalorder %s99, %s100
    %p114 = scmp.eq.s32.totalorder %s17, 1
    %p115 = por %p113, %p114
    %p117 = scmp.ne.s32.totalorder %s100, %s116
    %p118 = scmp.eq.s32.totalorder %s17, 0
    %p119 = por %p117, %p118
    %s120 = ssub.s32 %s19, %s33
    %s121 = ssub.s32 %s18, %s37
    %s122 = sor.u32 %s120, %s121
    %p123 = scmp.eq.s32.totalorder %s122, 0
    %s125 = sadd.s32 %s124, 1
    %s126 = scalar_select %p123, %s124, %s125
    %p129 = pneg %p123
    %p130 = scmp.eq.s32.totalorder %s11, 1
    %p131 = por %p129, %p130
    %p132 = scmp.ne.s32.totalorder %s124, %s127
    %p133 = scmp.eq.s32.totalorder %s11, 0
    %p134 = por %p132, %p133
    %p135 = scmp.ne.s32.totalorder %s124, %s127
    %p136 = scmp.eq.s32.totalorder %s16, 1
    %p137 = por %p135, %p136
    %p138 = scmp.ne.s32.totalorder %s127, %s128
    %p139 = scmp.eq.s32.totalorder %s16, 0
    %p140 = por %p138, %p139
    %p141 = scmp.ne.s32.totalorder %s127, %s128
    %p142 = scmp.eq.s32.totalorder %s17, 1
    %p143 = por %p141, %p142
    %p145 = scmp.ne.s32.totalorder %s128, %s144
    %p146 = scmp.eq.s32.totalorder %s17, 0
    %p147 = por %p145, %p146
    %s148 = ssub.s32 %s18, %s37
    %p149 = scmp.eq.s32.totalorder %s148, 0
    %s151 = sadd.s32 %s150, 1
    %s152 = scalar_select %p149, %s150, %s151
    %p155 = pneg %p149
    %p156 = scmp.eq.s32.totalorder %s11, 1
    %p157 = por %p155, %p156
    %p158 = scmp.ne.s32.totalorder %s150, %s153
    %p159 = scmp.eq.s32.totalorder %s11, 0
    %p160 = por %p158, %p159
    %p161 = scmp.ne.s32.totalorder %s150, %s153
    %p162 = scmp.eq.s32.totalorder %s16, 1
    %p163 = por %p161, %p162
    %p164 = scmp.ne.s32.totalorder %s153, %s154
    %p165 = scmp.eq.s32.totalorder %s16, 0
    %p166 = por %p164, %p165
    %p167 = scmp.ne.s32.totalorder %s153, %s154
    %p168 = scmp.eq.s32.totalorder %s17, 1
    %p169 = por %p167, %p168
    %p171 = scmp.ne.s32.totalorder %s154, %s170
    %p172 = scmp.eq.s32.totalorder %s17, 0
    %p173 = por %p171, %p172
    %p174 = scmp.le.s32.totalorder 1, %s11
    %p175 = scmp.lt.s32.totalorder %s11, 3
    %p176 = pnand %p174, %p175
    %p177 = pneg %p176
    // Predicated region
    $region9: #{unet_base_conv_forward.4} parent=5 // pred_check
      _
    $region10: #{unet_base_conv_forward.4} parent=5 // pred_check_branch
      %179 = sbr.rel (%p176) target = $region12
    $region11: #{unet_base_conv_forward.4} parent=5 // pred_region
      %s180 = ssub.s32 %s11, 1
      // Predicated region
      $region13: #{unet_base_conv_forward.4} parent=11 // pred_check
        %p181 = pneg %p86
      $region14: #{unet_base_conv_forward.4} parent=11 // pred_check_branch
        %183 = sbr.rel (%p181) target = $region16
      $region15: #{unet_base_conv_forward.4} parent=11 // pred_region
        %s184 = smul.u32 16, %s23
        %p185 = scmp.lt.s32.totalorder %s184, 15
        %s186 = scalar_select %p185, %s184, 15
        %p187 = scmp.lt.s32.totalorder %s21, 0
        %s188 = scalar_select %p187, %s21, 0
        %s189 = sadd.s32 %s188, %s186
        %s190 = smul.addr %s189, 4
        %s191 = scalar_lea.vmem %s1, %s190
        %s192 = smul.u32 16, %s23
      $region16: #{unet_base_conv_forward.4} parent=11 // pred_fallthru
        _
      // Predicated region
      $region17: #{unet_base_conv_forward.4} parent=11 // pred_check
        %p193 = pneg %p112
      $region18: #{unet_base_conv_forward.4} parent=11 // pred_check_branch
        %195 = sbr.rel (%p193) target = $region20
      $region19: #{unet_base_conv_forward.4} parent=11 // pred_region
        %p196 = scmp.lt.s32.totalorder %s21, 0
        %s197 = scalar_select %p196, %s21, 0
        %s198 = scalar_lea.vmem %s2, %s197
      $region20: #{unet_base_conv_forward.4} parent=11 // pred_fallthru
        _
    $region12: #{unet_base_conv_forward.4} parent=5 // pred_fallthru
      _
    %p199 = scmp.lt.s32.totalorder %s11, 2
    // Predicated region
    $region21: #{unet_base_conv_forward.4} parent=5 // pred_check
      %p200 = pneg %p199
    $region22: #{unet_base_conv_forward.4} parent=5 // pred_check_branch
      %202 = sbr.rel (%p200) target = $region24
    $region23: #{unet_base_conv_forward.4} parent=5 // pred_region
      // Predicated region
      $region25: #{unet_base_conv_forward.4} parent=23 // pred_check
        %p203 = pneg %p52
      $region26: #{unet_base_conv_forward.4} parent=23 // pred_check_branch
        %205 = sbr.rel (%p203) target = $region28
      $region27: #{unet_base_conv_forward.4} parent=23 // pred_region
        %s206 = smul.u32 32, %s19
        %p207 = scmp.lt.s32.totalorder %s206, 63
        %s208 = scalar_select %p207, %s206, 63
        %p209 = scmp.lt.s32.totalorder %s20, 0
        %s210 = scalar_select %p209, %s20, 0
        %s211 = sadd.s32 %s210, %s208
        %s212 = smul.addr %s211, 4
        %s213 = scalar_lea.vmem %s0, %s212
        %s214 = smul.u32 32, %s19
      $region28: #{unet_base_conv_forward.4} parent=23 // pred_fallthru
        _
    $region24: #{unet_base_conv_forward.4} parent=5 // pred_fallthru
      _
    %p215 = scmp.le.s32.totalorder 1, %s11
    %p216 = scmp.lt.s32.totalorder %s11, 3
    %p217 = pnand %p215, %p216
    %p218 = pneg %p217
    // Predicated region
    $region29: #{unet_base_conv_forward.4} parent=5 // pred_check
      _
    $region30: #{unet_base_conv_forward.4} parent=5 // pred_check_branch
      %220 = sbr.rel (%p217) target = $region32
    $region31: #{unet_base_conv_forward.4} parent=5 // pred_region
      %s221 = ssub.s32 %s11, 1
      %s222 = smul.u32 32, %s22
      %p223 = scmp.lt.s32.totalorder %s222, 63
      %s224 = scalar_select %p223, %s222, 63
      %p225 = scmp.lt.s32.totalorder %s23, 0
      %s226 = scalar_select %p225, %s23, 0
      %s227 = sadd.s32 %s226, %s224
      %s228 = smul.addr %s227, 4
      %s229 = scalar_lea.vmem %s0, %s228
      %p230 = pneg %p58
      %p231 = pneg %p55
      %s232 = smul.u32 16, %s23
      %p233 = scmp.lt.s32.totalorder %s232, 15
      %s234 = scalar_select %p233, %s232, 15
      %p235 = scmp.lt.s32.totalorder %s21, 0
      %s236 = scalar_select %p235, %s21, 0
      %s237 = sadd.s32 %s236, %s234
      %s238 = smul.addr %s237, 4
      %s239 = scalar_lea.vmem %s1, %s238
      %p240 = pneg %p86
      %p241 = pneg %p83
      %p242 = scmp.lt.s32.totalorder %s21, 0
      %s243 = scalar_select %p242, %s21, 0
      %s244 = scalar_lea.vmem %s2, %s243
      %p245 = pneg %p112
      %p246 = pneg %p109
      %p247 = pneg %p140
      %p248 = pneg %p137
      %s249 = smul.u32 32, %s22
      %p250 = scmp.lt.s32.totalorder %s249, 63
      %s251 = scalar_select %p250, %s249, 63
      %p252 = scmp.lt.s32.totalorder %s21, 0
      %s253 = scalar_select %p252, %s21, 0
      %s254 = sadd.s32 %s253, %s251
      %s255 = smul.addr %s254, 8
      %s256 = scalar_lea.vmem %s3, %s255
      %p257 = pneg %p166
      %p258 = pneg %p163
      %p259 = scmp.lt.s32.totalorder %s21, 0
      %s260 = scalar_select %p259, %s21, 0
      %s261 = smul.addr %s260, 2
      %s262 = scalar_lea.vmem %s4, %s261
      %s263 = smul.u32 32, %s22
      %p264 = scmp.lt.s32.totalorder %s263, 63
      %s265 = scalar_select %p264, %s263, 63
      %p266 = scmp.lt.s32.totalorder %s23, 0
      %s267 = scalar_select %p266, %s23, 0
      %s268 = sadd.s32 %s267, %s265
      %s269 = smul.addr %s268, 4
      %s270 = scalar_lea.vmem %s0, %s269
      %s271 = smul.u32 32, %s22
      %s272 = smul.u32 16, %s23
      %p273 = scmp.lt.s32.totalorder %s272, 15
      %s274 = scalar_select %p273, %s272, 15
      %p275 = scmp.lt.s32.totalorder %s21, 0
      %s276 = scalar_select %p275, %s21, 0
      %s277 = sadd.s32 %s276, %s274
      %s278 = smul.addr %s277, 4
      %s279 = scalar_lea.vmem %s1, %s278
      %s280 = smul.u32 16, %s23
      %p281 = scmp.lt.s32.totalorder %s21, 0
      %s282 = scalar_select %p281, %s21, 0
      %s283 = scalar_lea.vmem %s2, %s282
      %s284 = smul.u32 32, %s22
      %p285 = scmp.lt.s32.totalorder %s284, 63
      %s286 = scalar_select %p285, %s284, 63
      %p287 = scmp.lt.s32.totalorder %s21, 0
      %s288 = scalar_select %p287, %s21, 0
      %s289 = sadd.s32 %s288, %s286
      %s290 = smul.addr %s289, 8
      %s291 = scalar_lea.vmem %s3, %s290
      %s292 = smul.u32 32, %s22
      %p293 = scmp.lt.s32.totalorder %s21, 0
      %s294 = scalar_select %p293, %s21, 0
      %s295 = smul.addr %s294, 2
      %s296 = scalar_lea.vmem %s4, %s295
      %p298 = scmp.eq.s32.totalorder %s23, 0
      // Predicated region
      $region33: #{unet_base_conv_forward.4} parent=31 // pred_check
        %p299 = pneg %p298
      $region34: #{unet_base_conv_forward.4} parent=31 // pred_check_branch
        %301 = sbr.rel (%p299) target = $region36
      $region35: #{unet_base_conv_forward.4} parent=31 // pred_region
        %302 = vst [vmem:[#allocation2] sm:$0xff] 0.0
        %303 = vst [vmem:[#allocation2 + $0x8] sm:$0xff] 0.0
        %304 = vst [vmem:[#allocation2 + $0x10] sm:$0xff] 0.0
        %305 = vst [vmem:[#allocation2 + $0x18] sm:$0xff] 0.0
        %306 = vst [vmem:[#allocation2 + $0x20] sm:$0xff] 0.0
        %307 = vst [vmem:[#allocation2 + $0x28] sm:$0xff] 0.0
        %308 = vst [vmem:[#allocation2 + $0x30] sm:$0xff] 0.0
        %309 = vst [vmem:[#allocation2 + $0x38] sm:$0xff] 0.0
        %310 = vst [vmem:[#allocation2 + $0x40] sm:$0xff] 0.0
        %311 = vst [vmem:[#allocation2 + $0x48] sm:$0xff] 0.0
        %312 = vst [vmem:[#allocation2 + $0x50] sm:$0xff] 0.0
        %313 = vst [vmem:[#allocation2 + $0x58] sm:$0xff] 0.0
        %314 = vst [vmem:[#allocation2 + $0x60] sm:$0xff] 0.0
        %315 = vst [vmem:[#allocation2 + $0x68] sm:$0xff] 0.0
        %316 = vst [vmem:[#allocation2 + $0x70] sm:$0xff] 0.0
        %317 = vst [vmem:[#allocation2 + $0x78] sm:$0xff] 0.0
        %318 = vst [vmem:[#allocation2 + $0x80] sm:$0xff] 0.0
        %319 = vst [vmem:[#allocation2 + $0x88] sm:$0xff] 0.0
        %320 = vst [vmem:[#allocation2 + $0x90] sm:$0xff] 0.0
        %321 = vst [vmem:[#allocation2 + $0x98] sm:$0xff] 0.0
        %322 = vst [vmem:[#allocation2 + $0xa0] sm:$0xff] 0.0
        %323 = vst [vmem:[#allocation2 + $0xa8] sm:$0xff] 0.0
        %324 = vst [vmem:[#allocation2 + $0xb0] sm:$0xff] 0.0
        %325 = vst [vmem:[#allocation2 + $0xb8] sm:$0xff] 0.0
        %326 = vst [vmem:[#allocation2 + $0xc0] sm:$0xff] 0.0
        %327 = vst [vmem:[#allocation2 + $0xc8] sm:$0xff] 0.0
        %328 = vst [vmem:[#allocation2 + $0xd0] sm:$0xff] 0.0
        %329 = vst [vmem:[#allocation2 + $0xd8] sm:$0xff] 0.0
        %330 = vst [vmem:[#allocation2 + $0xe0] sm:$0xff] 0.0
        %331 = vst [vmem:[#allocation2 + $0xe8] sm:$0xff] 0.0
        %332 = vst [vmem:[#allocation2 + $0xf0] sm:$0xff] 0.0
        %333 = vst [vmem:[#allocation2 + $0xf8] sm:$0xff] 0.0
      $region36: #{unet_base_conv_forward.4} parent=31 // pred_fallthru
        _
      %p334 = scmp.eq.s32.totalorder %s22, 0
      %p335 = pnand %p334, %p298
      %p336 = pneg %p335
      // Predicated region
      $region37: #{unet_base_conv_forward.4} parent=31 // pred_check
        _
      $region38: #{unet_base_conv_forward.4} parent=31 // pred_check_branch
        %338 = sbr.rel (%p335) target = $region40
      $region39: #{unet_base_conv_forward.4} parent=31 // pred_region
        %339 = vst [vmem:[%s296] sm:$0x3] 0.0
      $region40: #{unet_base_conv_forward.4} parent=31 // pred_fallthru
        _
      %v340 = vld [vmem:[#allocation2] sm:$0xff]
      %v341 = vld [vmem:[#allocation2 + $0x8] sm:$0xff]
      %v342 = vld [vmem:[#allocation2 + $0x10] sm:$0xff]
      %v343 = vld [vmem:[#allocation2 + $0x18] sm:$0xff]
      %v344 = vld [vmem:[#allocation2 + $0x20] sm:$0xff]
      %v345 = vld [vmem:[#allocation2 + $0x28] sm:$0xff]
      %v346 = vld [vmem:[#allocation2 + $0x30] sm:$0xff]
      %v347 = vld [vmem:[#allocation2 + $0x38] sm:$0xff]
      %v348 = vld [vmem:[#allocation2 + $0x40] sm:$0xff]
      %v349 = vld [vmem:[#allocation2 + $0x48] sm:$0xff]
      %v350 = vld [vmem:[#allocation2 + $0x50] sm:$0xff]
      %v351 = vld [vmem:[#allocation2 + $0x58] sm:$0xff]
      %v352 = vld [vmem:[#allocation2 + $0x60] sm:$0xff]
      %v353 = vld [vmem:[#allocation2 + $0x68] sm:$0xff]
      %v354 = vld [vmem:[#allocation2 + $0x70] sm:$0xff]
      %v355 = vld [vmem:[#allocation2 + $0x78] sm:$0xff]
      %v356 = vld [vmem:[#allocation2 + $0x80] sm:$0xff]
      %v357 = vld [vmem:[#allocation2 + $0x88] sm:$0xff]
      %v358 = vld [vmem:[#allocation2 + $0x90] sm:$0xff]
      %v359 = vld [vmem:[#allocation2 + $0x98] sm:$0xff]
      %v360 = vld [vmem:[#allocation2 + $0xa0] sm:$0xff]
      %v361 = vld [vmem:[#allocation2 + $0xa8] sm:$0xff]
      %v362 = vld [vmem:[#allocation2 + $0xb0] sm:$0xff]
      %v363 = vld [vmem:[#allocation2 + $0xb8] sm:$0xff]
      %v364 = vld [vmem:[#allocation2 + $0xc0] sm:$0xff]
      %v365 = vld [vmem:[#allocation2 + $0xc8] sm:$0xff]
      %v366 = vld [vmem:[#allocation2 + $0xd0] sm:$0xff]
      %v367 = vld [vmem:[#allocation2 + $0xd8] sm:$0xff]
      %v368 = vld [vmem:[#allocation2 + $0xe0] sm:$0xff]
      %v369 = vld [vmem:[#allocation2 + $0xe8] sm:$0xff]
      %v370 = vld [vmem:[#allocation2 + $0xf0] sm:$0xff]
      %v371 = vld [vmem:[#allocation2 + $0xf8] sm:$0xff]
      %v372 = vld [vmem:[%s270] sm:$0xf]
      %v373 = vld [vmem:[%s270 + $0x4] sm:$0xf]
      %v374 = vld [vmem:[%s270 + $0x8] sm:$0xf]
      %v375 = vld [vmem:[%s270 + $0xc] sm:$0xf]
      %v376 = vld [vmem:[%s270 + $0x10] sm:$0xf]
      %v377 = vld [vmem:[%s270 + $0x14] sm:$0xf]
      %v378 = vld [vmem:[%s270 + $0x18] sm:$0xf]
      %v379 = vld [vmem:[%s270 + $0x1c] sm:$0xf]
      %v380 = vld [vmem:[%s270 + $0x20] sm:$0xf]
      %v381 = vld [vmem:[%s270 + $0x24] sm:$0xf]
      %v382 = vld [vmem:[%s270 + $0x28] sm:$0xf]
      %v383 = vld [vmem:[%s270 + $0x2c] sm:$0xf]
      %v384 = vld [vmem:[%s270 + $0x30] sm:$0xf]
      %v385 = vld [vmem:[%s270 + $0x34] sm:$0xf]
      %v386 = vld [vmem:[%s270 + $0x38] sm:$0xf]
      %v387 = vld [vmem:[%s270 + $0x3c] sm:$0xf]
      %v388 = vld [vmem:[%s270 + $0x40] sm:$0xf]
      %v389 = vld [vmem:[%s270 + $0x44] sm:$0xf]
      %v390 = vld [vmem:[%s270 + $0x48] sm:$0xf]
      %v391 = vld [vmem:[%s270 + $0x4c] sm:$0xf]
      %v392 = vld [vmem:[%s270 + $0x50] sm:$0xf]
      %v393 = vld [vmem:[%s270 + $0x54] sm:$0xf]
      %v394 = vld [vmem:[%s270 + $0x58] sm:$0xf]
      %v395 = vld [vmem:[%s270 + $0x5c] sm:$0xf]
      %v396 = vld [vmem:[%s270 + $0x60] sm:$0xf]
      %v397 = vld [vmem:[%s270 + $0x64] sm:$0xf]
      %v398 = vld [vmem:[%s270 + $0x68] sm:$0xf]
      %v399 = vld [vmem:[%s270 + $0x6c] sm:$0xf]
      %v400 = vld [vmem:[%s270 + $0x70] sm:$0xf]
      %v401 = vld [vmem:[%s270 + $0x74] sm:$0xf]
      %v402 = vld [vmem:[%s270 + $0x78] sm:$0xf]
      %v403 = vld [vmem:[%s270 + $0x7c] sm:$0xf]
      %v404 = vld [vmem:[%s279] sm:$0xf]
      %v405 = vld [vmem:[%s279 + $0x4] sm:$0xf]
      %v406 = vld [vmem:[%s279 + $0x8] sm:$0xf]
      %v407 = vld [vmem:[%s279 + $0xc] sm:$0xf]
      %v408 = vld [vmem:[%s279 + $0x10] sm:$0xf]
      %v409 = vld [vmem:[%s279 + $0x14] sm:$0xf]
      %v410 = vld [vmem:[%s279 + $0x18] sm:$0xf]
      %v411 = vld [vmem:[%s279 + $0x1c] sm:$0xf]
      %v412 = vld [vmem:[%s279 + $0x20] sm:$0xf]
      %v413 = vld [vmem:[%s279 + $0x24] sm:$0xf]
      %v414 = vld [vmem:[%s279 + $0x28] sm:$0xf]
      %v415 = vld [vmem:[%s279 + $0x2c] sm:$0xf]
      %v416 = vld [vmem:[%s279 + $0x30] sm:$0xf]
      %v417 = vld [vmem:[%s279 + $0x34] sm:$0xf]
      %v418 = vld [vmem:[%s279 + $0x38] sm:$0xf]
      %v419 = vld [vmem:[%s279 + $0x3c] sm:$0xf]
      %v452 = vunpack.c.l.b16 %v372
      %v453 = vunpack.c.l.b16 %v373
      %v454 = vunpack.c.l.b16 %v374
      %v455 = vunpack.c.l.b16 %v375
      %v456 = vunpack.c.l.b16 %v376
      %v457 = vunpack.c.l.b16 %v377
      %v458 = vunpack.c.l.b16 %v378
      %v459 = vunpack.c.l.b16 %v379
      %v460 = vunpack.c.l.b16 %v380
      %v461 = vunpack.c.l.b16 %v381
      %v462 = vunpack.c.l.b16 %v382
      %v463 = vunpack.c.l.b16 %v383
      %v464 = vunpack.c.l.b16 %v384
      %v465 = vunpack.c.l.b16 %v385
      %v466 = vunpack.c.l.b16 %v386
      %v467 = vunpack.c.l.b16 %v387
      %v468 = vunpack.c.l.b16 %v388
      %v469 = vunpack.c.l.b16 %v389
      %v470 = vunpack.c.l.b16 %v390
      %v471 = vunpack.c.l.b16 %v391
      %v472 = vunpack.c.l.b16 %v392
      %v473 = vunpack.c.l.b16 %v393
      %v474 = vunpack.c.l.b16 %v394
      %v475 = vunpack.c.l.b16 %v395
      %v476 = vunpack.c.l.b16 %v396
      %v477 = vunpack.c.l.b16 %v397
      %v478 = vunpack.c.l.b16 %v398
      %v479 = vunpack.c.l.b16 %v399
      %v480 = vunpack.c.l.b16 %v400
      %v481 = vunpack.c.l.b16 %v401
      %v482 = vunpack.c.l.b16 %v402
      %v483 = vunpack.c.l.b16 %v403
      %v484 = vpack.c.b16 %v453, %v452
      %v485 = vpack.c.b16 %v455, %v454
      %v486 = vpack.c.b16 %v457, %v456
      %v487 = vpack.c.b16 %v459, %v458
      %v488 = vpack.c.b16 %v461, %v460
      %v489 = vpack.c.b16 %v463, %v462
      %v490 = vpack.c.b16 %v465, %v464
      %v491 = vpack.c.b16 %v467, %v466
      %v492 = vpack.c.b16 %v469, %v468
      %v493 = vpack.c.b16 %v471, %v470
      %v494 = vpack.c.b16 %v473, %v472
      %v495 = vpack.c.b16 %v475, %v474
      %v496 = vpack.c.b16 %v477, %v476
      %v497 = vpack.c.b16 %v479, %v478
      %v498 = vpack.c.b16 %v481, %v480
      %v499 = vpack.c.b16 %v483, %v482
      %v532 = vunpack.c.l.b16 %v404
      %v533 = vunpack.c.l.b16 %v405
      %v534 = vunpack.c.l.b16 %v406
      %v535 = vunpack.c.l.b16 %v407
      %v536 = vunpack.c.l.b16 %v408
      %v537 = vunpack.c.l.b16 %v409
      %v538 = vunpack.c.l.b16 %v410
      %v539 = vunpack.c.l.b16 %v411
      %v540 = vunpack.c.l.b16 %v412
      %v541 = vunpack.c.l.b16 %v413
      %v542 = vunpack.c.l.b16 %v414
      %v543 = vunpack.c.l.b16 %v415
      %v544 = vunpack.c.l.b16 %v416
      %v545 = vunpack.c.l.b16 %v417
      %v546 = vunpack.c.l.b16 %v418
      %v547 = vunpack.c.l.b16 %v419
      %v548 = vpack.c.b16 %v533, %v532
      %v549 = vpack.c.b16 %v535, %v534
      %v550 = vpack.c.b16 %v537, %v536
      %v551 = vpack.c.b16 %v539, %v538
      %v552 = vpack.c.b16 %v541, %v540
      %v553 = vpack.c.b16 %v543, %v542
      %v554 = vpack.c.b16 %v545, %v544
      %v555 = vpack.c.b16 %v547, %v546
      %564 = vmatprep.subr.bf16.mxu0 0
      %565 = vmatpush1.bf16.msra.mxu0 %v548
      %566 = vmatprep.subr.bf16.mxu0 0
      %567 = vmatpush1.bf16.msra.mxu0 %v549
      %568 = vmatprep.subr.bf16.mxu0 0
      %569 = vmatpush1.bf16.msra.mxu0 %v550
      %570 = vmatprep.subr.bf16.mxu0 0
      %571 = vmatpush1.bf16.msra.mxu0 %v551
      %572 = vmatprep.subr.bf16.mxu0 0
      %573 = vmatpush1.bf16.msra.mxu0 %v552
      %574 = vmatprep.subr.bf16.mxu0 0
      %575 = vmatpush1.bf16.msra.mxu0 %v553
      %576 = vmatprep.subr.bf16.mxu0 0
      %577 = vmatpush1.bf16.msra.mxu0 %v554
      %578 = vmatprep.subr.bf16.mxu0 0
      %579 = vmatpush1.bf16.msra.mxu0 %v555
      %580 = vmatprep.subr.bf16.mxu0 0
      %581 = vmatpush1.bf16.msra.mxu0 0
      %582 = vmatprep.subr.bf16.mxu0 0
      %583 = vmatpush1.bf16.msra.mxu0 0
      %584 = vmatprep.subr.bf16.mxu0 0
      %585 = vmatpush1.bf16.msra.mxu0 0
      %586 = vmatprep.subr.bf16.mxu0 0
      %587 = vmatpush1.bf16.msra.mxu0 0
      %588 = vmatprep.subr.bf16.mxu0 0
      %589 = vmatpush1.bf16.msra.mxu0 0
      %590 = vmatprep.subr.bf16.mxu0 0
      %591 = vmatpush1.bf16.msra.mxu0 0
      %592 = vmatprep.subr.bf16.mxu0 0
      %593 = vmatpush1.bf16.msra.mxu0 0
      %594 = vmatprep.subr.bf16.mxu0 0
      %595 = vmatpush1.bf16.msra.mxu0 0
      %596 = vmatprep.mubr.bf16.mxu0 0
      %597 = vmatmul.mubr.bf16.gmra.mrb[0].mxu0 %v484
      %v598 = vpop.f32.mrb[0].mxu0
      %v599 = vadd.f32 0.0, %v598
      %v600 = vpop.f32.mrb[0].mxu0
      %v601 = vpop.f32.mrb[0].mxu0
      %v602 = vadd.f32 0.0, %v601
      %v603 = vpop.f32.mrb[0].mxu0
      %604 = vmatprep.mubr.bf16.mxu0 0
      %605 = vmatmul.mubr.bf16.gmra.mrb[0].mxu0 %v485
      %v606 = vpop.f32.mrb[0].mxu0
      %v607 = vadd.f32 0.0, %v606
      %v608 = vpop.f32.mrb[0].mxu0
      %v609 = vpop.f32.mrb[0].mxu0
      %v610 = vadd.f32 0.0, %v609
      %v611 = vpop.f32.mrb[0].mxu0
      %612 = vmatprep.mubr.bf16.mxu0 0
      %613 = vmatmul.mubr.bf16.gmra.mrb[0].mxu0 %v486
      %v614 = vpop.f32.mrb[0].mxu0
      %v615 = vadd.f32 0.0, %v614
      %v616 = vpop.f32.mrb[0].mxu0
      %v617 = vpop.f32.mrb[0].mxu0
      %v618 = vadd.f32 0.0, %v617
      %v619 = vpop.f32.mrb[0].mxu0
      %620 = vmatprep.mubr.bf16.mxu0 0
      %621 = vmatmul.mubr.bf16.gmra.mrb[0].mxu0 %v487
      %v622 = vpop.f32.mrb[0].mxu0
      %v623 = vadd.f32 0.0, %v622
      %v624 = vpop.f32.mrb[0].mxu0
      %v625 = vpop.f32.mrb[0].mxu0
      %v626 = vadd.f32 0.0, %v625
      %v627 = vpop.f32.mrb[0].mxu0
      %628 = vmatprep.mubr.bf16.mxu0 0
      %629 = vmatmul.mubr.bf16.gmra.mrb[0].mxu0 %v488
      %v630 = vpop.f32.mrb[0].mxu0
      %v631 = vadd.f32 0.0, %v630
      %v632 = vpop.f32.mrb[0].mxu0
      %v633 = vpop.f32.mrb[0].mxu0
      %v634 = vadd.f32 0.0, %v633
      %v635 = vpop.f32.mrb[0].mxu0
      %636 = vmatprep.mubr.bf16.mxu0 0
      %637 = vmatmul.mubr.bf16.gmra.mrb[0].mxu0 %v489
      %v638 = vpop.f32.mrb[0].mxu0
      %v639 = vadd.f32 0.0, %v638
      %v640 = vpop.f32.mrb[0].mxu0
      %v641 = vpop.f32.mrb[0].mxu0
      %v642 = vadd.f32 0.0, %v641
      %v643 = vpop.f32.mrb[0].mxu0
      %644 = vmatprep.mubr.bf16.mxu0 0
      %645 = vmatmul.mubr.bf16.gmra.mrb[0].mxu0 %v490
      %v646 = vpop.f32.mrb[0].mxu0
      %v647 = vadd.f32 0.0, %v646
      %v648 = vpop.f32.mrb[0].mxu0
      %v649 = vpop.f32.mrb[0].mxu0
      %v650 = vadd.f32 0.0, %v649
      %v651 = vpop.f32.mrb[0].mxu0
      %652 = vmatprep.mubr.bf16.mxu0 0
      %653 = vmatmul.mubr.bf16.gmra.mrb[0].mxu0 %v491
      %v654 = vpop.f32.mrb[0].mxu0
      %v655 = vadd.f32 0.0, %v654
      %v656 = vpop.f32.mrb[0].mxu0
      %v657 = vpop.f32.mrb[0].mxu0
      %v658 = vadd.f32 0.0, %v657
      %v659 = vpop.f32.mrb[0].mxu0
      %660 = vmatprep.mubr.bf16.mxu0 0
      %661 = vmatmul.mubr.bf16.gmra.mrb[0].mxu0 %v492
      %v662 = vpop.f32.mrb[0].mxu0
      %v663 = vadd.f32 0.0, %v662
      %v664 = vpop.f32.mrb[0].mxu0
      %v665 = vpop.f32.mrb[0].mxu0
      %v666 = vadd.f32 0.0, %v665
      %v667 = vpop.f32.mrb[0].mxu0
      %668 = vmatprep.mubr.bf16.mxu0 0
      %669 = vmatmul.mubr.bf16.gmra.mrb[0].mxu0 %v493
      %v670 = vpop.f32.mrb[0].mxu0
      %v671 = vadd.f32 0.0, %v670
      %v672 = vpop.f32.mrb[0].mxu0
      %v673 = vpop.f32.mrb[0].mxu0
      %v674 = vadd.f32 0.0, %v673
      %v675 = vpop.f32.mrb[0].mxu0
      %676 = vmatprep.mubr.bf16.mxu0 0
      %677 = vmatmul.mubr.bf16.gmra.mrb[0].mxu0 %v494
      %v678 = vpop.f32.mrb[0].mxu0
      %v679 = vadd.f32 0.0, %v678
      %v680 = vpop.f32.mrb[0].mxu0
      %v681 = vpop.f32.mrb[0].mxu0
      %v682 = vadd.f32 0.0, %v681
      %v683 = vpop.f32.mrb[0].mxu0
      %684 = vmatprep.mubr.bf16.mxu0 0
      %685 = vmatmul.mubr.bf16.gmra.mrb[0].mxu0 %v495
      %v686 = vpop.f32.mrb[0].mxu0
      %v687 = vadd.f32 0.0, %v686
      %v688 = vpop.f32.mrb[0].mxu0
      %v689 = vpop.f32.mrb[0].mxu0
      %v690 = vadd.f32 0.0, %v689
      %v691 = vpop.f32.mrb[0].mxu0
      %692 = vmatprep.mubr.bf16.mxu0 0
      %693 = vmatmul.mubr.bf16.gmra.mrb[0].mxu0 %v496
      %v694 = vpop.f32.mrb[0].mxu0
      %v695 = vadd.f32 0.0, %v694
      %v696 = vpop.f32.mrb[0].mxu0
      %v697 = vpop.f32.mrb[0].mxu0
      %v698 = vadd.f32 0.0, %v697
      %v699 = vpop.f32.mrb[0].mxu0
      %700 = vmatprep.mubr.bf16.mxu0 0
      %701 = vmatmul.mubr.bf16.gmra.mrb[0].mxu0 %v497
      %v702 = vpop.f32.mrb[0].mxu0
      %v703 = vadd.f32 0.0, %v702
      %v704 = vpop.f32.mrb[0].mxu0
      %v705 = vpop.f32.mrb[0].mxu0
      %v706 = vadd.f32 0.0, %v705
      %v707 = vpop.f32.mrb[0].mxu0
      %708 = vmatprep.mubr.bf16.mxu0 0
      %709 = vmatmul.mubr.bf16.gmra.mrb[0].mxu0 %v498
      %v710 = vpop.f32.mrb[0].mxu0
      %v711 = vadd.f32 0.0, %v710
      %v712 = vpop.f32.mrb[0].mxu0
      %v713 = vpop.f32.mrb[0].mxu0
      %v714 = vadd.f32 0.0, %v713
      %v715 = vpop.f32.mrb[0].mxu0
      %716 = vmatprep.mubr.bf16.mxu0 0
      %717 = vmatmul.mubr.bf16.gmra.mrb[0].mxu0 %v499
      %v718 = vpop.f32.mrb[0].mxu0
      %v719 = vadd.f32 0.0, %v718
      %v720 = vpop.f32.mrb[0].mxu0
      %v721 = vpop.f32.mrb[0].mxu0
      %v722 = vadd.f32 0.0, %v721
      %v723 = vpop.f32.mrb[0].mxu0
      %724 = vdwg.mxu0
      %v725 = vadd.f32 %v340, %v599
      %v726 = vadd.f32 %v341, %v602
      %v727 = vadd.f32 %v342, %v607
      %v728 = vadd.f32 %v343, %v610
      %v729 = vadd.f32 %v344, %v615
      %v730 = vadd.f32 %v345, %v618
      %v731 = vadd.f32 %v346, %v623
      %v732 = vadd.f32 %v347, %v626
      %v733 = vadd.f32 %v348, %v631
      %v734 = vadd.f32 %v349, %v634
      %v735 = vadd.f32 %v350, %v639
      %v736 = vadd.f32 %v351, %v642
      %v737 = vadd.f32 %v352, %v647
      %v738 = vadd.f32 %v353, %v650
      %v739 = vadd.f32 %v354, %v655
      %v740 = vadd.f32 %v355, %v658
      %v741 = vadd.f32 %v356, %v663
      %v742 = vadd.f32 %v357, %v666
      %v743 = vadd.f32 %v358, %v671
      %v744 = vadd.f32 %v359, %v674
      %v745 = vadd.f32 %v360, %v679
      %v746 = vadd.f32 %v361, %v682
      %v747 = vadd.f32 %v362, %v687
      %v748 = vadd.f32 %v363, %v690
      %v749 = vadd.f32 %v364, %v695
      %v750 = vadd.f32 %v365, %v698
      %v751 = vadd.f32 %v366, %v703
      %v752 = vadd.f32 %v367, %v706
      %v753 = vadd.f32 %v368, %v711
      %v754 = vadd.f32 %v369, %v714
      %v755 = vadd.f32 %v370, %v719
      %v756 = vadd.f32 %v371, %v722
      %757 = vst [vmem:[#allocation2] sm:$0xff] %v725
      %758 = vst [vmem:[#allocation2 + $0x8] sm:$0xff] %v726
      %759 = vst [vmem:[#allocation2 + $0x10] sm:$0xff] %v727
      %760 = vst [vmem:[#allocation2 + $0x18] sm:$0xff] %v728
      %761 = vst [vmem:[#allocation2 + $0x20] sm:$0xff] %v729
      %762 = vst [vmem:[#allocation2 + $0x28] sm:$0xff] %v730
      %763 = vst [vmem:[#allocation2 + $0x30] sm:$0xff] %v731
      %764 = vst [vmem:[#allocation2 + $0x38] sm:$0xff] %v732
      %765 = vst [vmem:[#allocation2 + $0x40] sm:$0xff] %v733
      %766 = vst [vmem:[#allocation2 + $0x48] sm:$0xff] %v734
      %767 = vst [vmem:[#allocation2 + $0x50] sm:$0xff] %v735
      %768 = vst [vmem:[#allocation2 + $0x58] sm:$0xff] %v736
      %769 = vst [vmem:[#allocation2 + $0x60] sm:$0xff] %v737
      %770 = vst [vmem:[#allocation2 + $0x68] sm:$0xff] %v738
      %771 = vst [vmem:[#allocation2 + $0x70] sm:$0xff] %v739
      %772 = vst [vmem:[#allocation2 + $0x78] sm:$0xff] %v740
      %773 = vst [vmem:[#allocation2 + $0x80] sm:$0xff] %v741
      %774 = vst [vmem:[#allocation2 + $0x88] sm:$0xff] %v742
      %775 = vst [vmem:[#allocation2 + $0x90] sm:$0xff] %v743
      %776 = vst [vmem:[#allocation2 + $0x98] sm:$0xff] %v744
      %777 = vst [vmem:[#allocation2 + $0xa0] sm:$0xff] %v745
      %778 = vst [vmem:[#allocation2 + $0xa8] sm:$0xff] %v746
      %779 = vst [vmem:[#allocation2 + $0xb0] sm:$0xff] %v747
      %780 = vst [vmem:[#allocation2 + $0xb8] sm:$0xff] %v748
      %781 = vst [vmem:[#allocation2 + $0xc0] sm:$0xff] %v749
      %782 = vst [vmem:[#allocation2 + $0xc8] sm:$0xff] %v750
      %783 = vst [vmem:[#allocation2 + $0xd0] sm:$0xff] %v751
      %784 = vst [vmem:[#allocation2 + $0xd8] sm:$0xff] %v752
      %785 = vst [vmem:[#allocation2 + $0xe0] sm:$0xff] %v753
      %786 = vst [vmem:[#allocation2 + $0xe8] sm:$0xff] %v754
      %787 = vst [vmem:[#allocation2 + $0xf0] sm:$0xff] %v755
      %788 = vst [vmem:[#allocation2 + $0xf8] sm:$0xff] %v756
      // Predicated region
      $region41: #{unet_base_conv_forward.4} parent=31 // pred_check
        %p789 = pneg %p298
      $region42: #{unet_base_conv_forward.4} parent=31 // pred_check_branch
        %791 = sbr.rel (%p789) target = $region44
      $region43: #{unet_base_conv_forward.4} parent=31 // pred_region
        %v792 = vld [vmem:[#allocation2] sm:$0xff]
        %v793 = vld [vmem:[#allocation2 + $0x8] sm:$0xff]
        %v794 = vld [vmem:[#allocation2 + $0x10] sm:$0xff]
        %v795 = vld [vmem:[#allocation2 + $0x18] sm:$0xff]
        %v796 = vld [vmem:[#allocation2 + $0x20] sm:$0xff]
        %v797 = vld [vmem:[#allocation2 + $0x28] sm:$0xff]
        %v798 = vld [vmem:[#allocation2 + $0x30] sm:$0xff]
        %v799 = vld [vmem:[#allocation2 + $0x38] sm:$0xff]
        %v800 = vld [vmem:[#allocation2 + $0x40] sm:$0xff]
        %v801 = vld [vmem:[#allocation2 + $0x48] sm:$0xff]
        %v802 = vld [vmem:[#allocation2 + $0x50] sm:$0xff]
        %v803 = vld [vmem:[#allocation2 + $0x58] sm:$0xff]
        %v804 = vld [vmem:[#allocation2 + $0x60] sm:$0xff]
        %v805 = vld [vmem:[#allocation2 + $0x68] sm:$0xff]
        %v806 = vld [vmem:[#allocation2 + $0x70] sm:$0xff]
        %v807 = vld [vmem:[#allocation2 + $0x78] sm:$0xff]
        %v808 = vld [vmem:[#allocation2 + $0x80] sm:$0xff]
        %v809 = vld [vmem:[#allocation2 + $0x88] sm:$0xff]
        %v810 = vld [vmem:[#allocation2 + $0x90] sm:$0xff]
        %v811 = vld [vmem:[#allocation2 + $0x98] sm:$0xff]
        %v812 = vld [vmem:[#allocation2 + $0xa0] sm:$0xff]
        %v813 = vld [vmem:[#allocation2 + $0xa8] sm:$0xff]
        %v814 = vld [vmem:[#allocation2 + $0xb0] sm:$0xff]
        %v815 = vld [vmem:[#allocation2 + $0xb8] sm:$0xff]
        %v816 = vld [vmem:[#allocation2 + $0xc0] sm:$0xff]
        %v817 = vld [vmem:[#allocation2 + $0xc8] sm:$0xff]
        %v818 = vld [vmem:[#allocation2 + $0xd0] sm:$0xff]
        %v819 = vld [vmem:[#allocation2 + $0xd8] sm:$0xff]
        %v820 = vld [vmem:[#allocation2 + $0xe0] sm:$0xff]
        %v821 = vld [vmem:[#allocation2 + $0xe8] sm:$0xff]
        %v822 = vld [vmem:[#allocation2 + $0xf0] sm:$0xff]
        %v823 = vld [vmem:[#allocation2 + $0xf8] sm:$0xff]
        %v824 = vld [vmem:[%s283] sm:$0x1]
        %v826 = vlaneseq
        %v827 = vshrl.u32 %v826, 7
        %v828 = vsub.s32 0, %v827
        %v829 = vrot.slane %v824, %v828
        %v831 = vadd.f32 %v792, %v829
        %v832 = vadd.f32 %v793, %v829
        %v833 = vadd.f32 %v794, %v829
        %v834 = vadd.f32 %v795, %v829
        %v835 = vadd.f32 %v796, %v829
        %v836 = vadd.f32 %v797, %v829
        %v837 = vadd.f32 %v798, %v829
        %v838 = vadd.f32 %v799, %v829
        %v839 = vadd.f32 %v800, %v829
        %v840 = vadd.f32 %v801, %v829
        %v841 = vadd.f32 %v802, %v829
        %v842 = vadd.f32 %v803, %v829
        %v843 = vadd.f32 %v804, %v829
        %v844 = vadd.f32 %v805, %v829
        %v845 = vadd.f32 %v806, %v829
        %v846 = vadd.f32 %v807, %v829
        %v847 = vadd.f32 %v808, %v829
        %v848 = vadd.f32 %v809, %v829
        %v849 = vadd.f32 %v810, %v829
        %v850 = vadd.f32 %v811, %v829
        %v851 = vadd.f32 %v812, %v829
        %v852 = vadd.f32 %v813, %v829
        %v853 = vadd.f32 %v814, %v829
        %v854 = vadd.f32 %v815, %v829
        %v855 = vadd.f32 %v816, %v829
        %v856 = vadd.f32 %v817, %v829
        %v857 = vadd.f32 %v818, %v829
        %v858 = vadd.f32 %v819, %v829
        %v859 = vadd.f32 %v820, %v829
        %v860 = vadd.f32 %v821, %v829
        %v861 = vadd.f32 %v822, %v829
        %v862 = vadd.f32 %v823, %v829
        %863 = vst [vmem:[%s291] sm:$0xff] %v831
        %864 = vst [vmem:[%s291 + $0x8] sm:$0xff] %v832
        %865 = vst [vmem:[%s291 + $0x10] sm:$0xff] %v833
        %866 = vst [vmem:[%s291 + $0x18] sm:$0xff] %v834
        %867 = vst [vmem:[%s291 + $0x20] sm:$0xff] %v835
        %868 = vst [vmem:[%s291 + $0x28] sm:$0xff] %v836
        %869 = vst [vmem:[%s291 + $0x30] sm:$0xff] %v837
        %870 = vst [vmem:[%s291 + $0x38] sm:$0xff] %v838
        %871 = vst [vmem:[%s291 + $0x40] sm:$0xff] %v839
        %872 = vst [vmem:[%s291 + $0x48] sm:$0xff] %v840
        %873 = vst [vmem:[%s291 + $0x50] sm:$0xff] %v841
        %874 = vst [vmem:[%s291 + $0x58] sm:$0xff] %v842
        %875 = vst [vmem:[%s291 + $0x60] sm:$0xff] %v843
        %876 = vst [vmem:[%s291 + $0x68] sm:$0xff] %v844
        %877 = vst [vmem:[%s291 + $0x70] sm:$0xff] %v845
        %878 = vst [vmem:[%s291 + $0x78] sm:$0xff] %v846
        %879 = vst [vmem:[%s291 + $0x80] sm:$0xff] %v847
        %880 = vst [vmem:[%s291 + $0x88] sm:$0xff] %v848
        %881 = vst [vmem:[%s291 + $0x90] sm:$0xff] %v849
        %882 = vst [vmem:[%s291 + $0x98] sm:$0xff] %v850
        %883 = vst [vmem:[%s291 + $0xa0] sm:$0xff] %v851
        %884 = vst [vmem:[%s291 + $0xa8] sm:$0xff] %v852
        %885 = vst [vmem:[%s291 + $0xb0] sm:$0xff] %v853
        %886 = vst [vmem:[%s291 + $0xb8] sm:$0xff] %v854
        %887 = vst [vmem:[%s291 + $0xc0] sm:$0xff] %v855
        %888 = vst [vmem:[%s291 + $0xc8] sm:$0xff] %v856
        %889 = vst [vmem:[%s291 + $0xd0] sm:$0xff] %v857
        %890 = vst [vmem:[%s291 + $0xd8] sm:$0xff] %v858
        %891 = vst [vmem:[%s291 + $0xe0] sm:$0xff] %v859
        %892 = vst [vmem:[%s291 + $0xe8] sm:$0xff] %v860
        %893 = vst [vmem:[%s291 + $0xf0] sm:$0xff] %v861
        %894 = vst [vmem:[%s291 + $0xf8] sm:$0xff] %v862
        %v895 = vlaneseq
        %v896 = vshrl.u32 %v895, 7
        %v897 = vadd.s32 %v896, 8
        %v898 = vadd.s32 %v896, 16
        %v899 = vadd.s32 %v896, 24
        %v900 = vadd.s32 %v896, 32
        %v901 = vadd.s32 %v896, 40
        %v902 = vadd.s32 %v896, 48
        %v903 = vadd.s32 %v896, 56
        %v904 = vadd.s32 %v896, 64
        %v905 = vadd.s32 %v896, 72
        %v906 = vadd.s32 %v896, 80
        %v907 = vadd.s32 %v896, 88
        %v908 = vadd.s32 %v896, 96
        %v909 = vadd.s32 %v896, 104
        %v910 = vadd.s32 %v896, 112
        %v911 = vadd.s32 %v896, 120
        %v912 = vadd.s32 %v896, 128
        %v913 = vadd.s32 %v896, 136
        %v914 = vadd.s32 %v896, 144
        %v915 = vadd.s32 %v896, 152
        %v916 = vadd.s32 %v896, 160
        %v917 = vadd.s32 %v896, 168
        %v918 = vadd.s32 %v896, 176
        %v919 = vadd.s32 %v896, 184
        %v920 = vadd.s32 %v896, 192
        %v921 = vadd.s32 %v896, 200
        %v922 = vadd.s32 %v896, 208
        %v923 = vadd.s32 %v896, 216
        %v924 = vadd.s32 %v896, 224
        %v925 = vadd.s32 %v896, 232
        %v926 = vadd.s32 %v896, 240
        %v927 = vadd.s32 %v896, 248
        %s928 = smul.u32 %s22, 256
        %v929 = vstv %s928
        %v930 = vadd.s32 %v896, %v929
        %v931 = vadd.s32 %v897, %v929
        %v932 = vadd.s32 %v898, %v929
        %v933 = vadd.s32 %v899, %v929
        %v934 = vadd.s32 %v900, %v929
        %v935 = vadd.s32 %v901, %v929
        %v936 = vadd.s32 %v902, %v929
        %v937 = vadd.s32 %v903, %v929
        %v938 = vadd.s32 %v904, %v929
        %v939 = vadd.s32 %v905, %v929
        %v940 = vadd.s32 %v906, %v929
        %v941 = vadd.s32 %v907, %v929
        %v942 = vadd.s32 %v908, %v929
        %v943 = vadd.s32 %v909, %v929
        %v944 = vadd.s32 %v910, %v929
        %v945 = vadd.s32 %v911, %v929
        %v946 = vadd.s32 %v912, %v929
        %v947 = vadd.s32 %v913, %v929
        %v948 = vadd.s32 %v914, %v929
        %v949 = vadd.s32 %v915, %v929
        %v950 = vadd.s32 %v916, %v929
        %v951 = vadd.s32 %v917, %v929
        %v952 = vadd.s32 %v918, %v929
        %v953 = vadd.s32 %v919, %v929
        %v954 = vadd.s32 %v920, %v929
        %v955 = vadd.s32 %v921, %v929
        %v956 = vadd.s32 %v922, %v929
        %v957 = vadd.s32 %v923, %v929
        %v958 = vadd.s32 %v924, %v929
        %v959 = vadd.s32 %v925, %v929
        %v960 = vadd.s32 %v926, %v929
        %v961 = vadd.s32 %v927, %v929
        %vm962 = vcmp.lt.s32.totalorder %v930, 512
        %vm963 = vcmp.lt.s32.totalorder %v931, 512
        %vm964 = vcmp.lt.s32.totalorder %v932, 512
        %vm965 = vcmp.lt.s32.totalorder %v933, 512
        %vm966 = vcmp.lt.s32.totalorder %v934, 512
        %vm967 = vcmp.lt.s32.totalorder %v935, 512
        %vm968 = vcmp.lt.s32.totalorder %v936, 512
        %vm969 = vcmp.lt.s32.totalorder %v937, 512
        %vm970 = vcmp.lt.s32.totalorder %v938, 512
        %vm971 = vcmp.lt.s32.totalorder %v939, 512
        %vm972 = vcmp.lt.s32.totalorder %v940, 512
        %vm973 = vcmp.lt.s32.totalorder %v941, 512
        %vm974 = vcmp.lt.s32.totalorder %v942, 512
        %vm975 = vcmp.lt.s32.totalorder %v943, 512
        %vm976 = vcmp.lt.s32.totalorder %v944, 512
        %vm977 = vcmp.lt.s32.totalorder %v945, 512
        %vm978 = vcmp.lt.s32.totalorder %v946, 512
        %vm979 = vcmp.lt.s32.totalorder %v947, 512
        %vm980 = vcmp.lt.s32.totalorder %v948, 512
        %vm981 = vcmp.lt.s32.totalorder %v949, 512
        %vm982 = vcmp.lt.s32.totalorder %v950, 512
        %vm983 = vcmp.lt.s32.totalorder %v951, 512
        %vm984 = vcmp.lt.s32.totalorder %v952, 512
        %vm985 = vcmp.lt.s32.totalorder %v953, 512
        %vm986 = vcmp.lt.s32.totalorder %v954, 512
        %vm987 = vcmp.lt.s32.totalorder %v955, 512
        %vm988 = vcmp.lt.s32.totalorder %v956, 512
        %vm989 = vcmp.lt.s32.totalorder %v957, 512
        %vm990 = vcmp.lt.s32.totalorder %v958, 512
        %vm991 = vcmp.lt.s32.totalorder %v959, 512
        %vm992 = vcmp.lt.s32.totalorder %v960, 512
        %vm993 = vcmp.lt.s32.totalorder %v961, 512
        %v994 = vsel %vm962, 1, 0
        %v995 = vsel %vm963, 1, 0
        %v996 = vsel %vm964, 1, 0
        %v997 = vsel %vm965, 1, 0
        %v998 = vsel %vm966, 1, 0
        %v999 = vsel %vm967, 1, 0
        %v1000 = vsel %vm968, 1, 0
        %v1001 = vsel %vm969, 1, 0
        %v1002 = vsel %vm970, 1, 0
        %v1003 = vsel %vm971, 1, 0
        %v1004 = vsel %vm972, 1, 0
        %v1005 = vsel %vm973, 1, 0
        %v1006 = vsel %vm974, 1, 0
        %v1007 = vsel %vm975, 1, 0
        %v1008 = vsel %vm976, 1, 0
        %v1009 = vsel %vm977, 1, 0
        %v1010 = vsel %vm978, 1, 0
        %v1011 = vsel %vm979, 1, 0
        %v1012 = vsel %vm980, 1, 0
        %v1013 = vsel %vm981, 1, 0
        %v1014 = vsel %vm982, 1, 0
        %v1015 = vsel %vm983, 1, 0
        %v1016 = vsel %vm984, 1, 0
        %v1017 = vsel %vm985, 1, 0
        %v1018 = vsel %vm986, 1, 0
        %v1019 = vsel %vm987, 1, 0
        %v1020 = vsel %vm988, 1, 0
        %v1021 = vsel %vm989, 1, 0
        %v1022 = vsel %vm990, 1, 0
        %v1023 = vsel %vm991, 1, 0
        %v1024 = vsel %vm992, 1, 0
        %v1025 = vsel %vm993, 1, 0
        %v1026 = vcvt.s32.f32 %v994
        %v1027 = vcvt.s32.f32 %v995
        %v1028 = vcvt.s32.f32 %v996
        %v1029 = vcvt.s32.f32 %v997
        %v1030 = vcvt.s32.f32 %v998
        %v1031 = vcvt.s32.f32 %v999
        %v1032 = vcvt.s32.f32 %v1000
        %v1033 = vcvt.s32.f32 %v1001
        %v1034 = vcvt.s32.f32 %v1002
        %v1035 = vcvt.s32.f32 %v1003
        %v1036 = vcvt.s32.f32 %v1004
        %v1037 = vcvt.s32.f32 %v1005
        %v1038 = vcvt.s32.f32 %v1006
        %v1039 = vcvt.s32.f32 %v1007
        %v1040 = vcvt.s32.f32 %v1008
        %v1041 = vcvt.s32.f32 %v1009
        %v1042 = vcvt.s32.f32 %v1010
        %v1043 = vcvt.s32.f32 %v1011
        %v1044 = vcvt.s32.f32 %v1012
        %v1045 = vcvt.s32.f32 %v1013
        %v1046 = vcvt.s32.f32 %v1014
        %v1047 = vcvt.s32.f32 %v1015
        %v1048 = vcvt.s32.f32 %v1016
        %v1049 = vcvt.s32.f32 %v1017
        %v1050 = vcvt.s32.f32 %v1018
        %v1051 = vcvt.s32.f32 %v1019
        %v1052 = vcvt.s32.f32 %v1020
        %v1053 = vcvt.s32.f32 %v1021
        %v1054 = vcvt.s32.f32 %v1022
        %v1055 = vcvt.s32.f32 %v1023
        %v1056 = vcvt.s32.f32 %v1024
        %v1057 = vcvt.s32.f32 %v1025
        %v1058 = vmul.f32 %v831, %v1026
        %v1059 = vmul.f32 %v832, %v1027
        %v1060 = vmul.f32 %v833, %v1028
        %v1061 = vmul.f32 %v834, %v1029
        %v1062 = vmul.f32 %v835, %v1030
        %v1063 = vmul.f32 %v836, %v1031
        %v1064 = vmul.f32 %v837, %v1032
        %v1065 = vmul.f32 %v838, %v1033
        %v1066 = vmul.f32 %v839, %v1034
        %v1067 = vmul.f32 %v840, %v1035
        %v1068 = vmul.f32 %v841, %v1036
        %v1069 = vmul.f32 %v842, %v1037
        %v1070 = vmul.f32 %v843, %v1038
        %v1071 = vmul.f32 %v844, %v1039
        %v1072 = vmul.f32 %v845, %v1040
        %v1073 = vmul.f32 %v846, %v1041
        %v1074 = vmul.f32 %v847, %v1042
        %v1075 = vmul.f32 %v848, %v1043
        %v1076 = vmul.f32 %v849, %v1044
        %v1077 = vmul.f32 %v850, %v1045
        %v1078 = vmul.f32 %v851, %v1046
        %v1079 = vmul.f32 %v852, %v1047
        %v1080 = vmul.f32 %v853, %v1048
        %v1081 = vmul.f32 %v854, %v1049
        %v1082 = vmul.f32 %v855, %v1050
        %v1083 = vmul.f32 %v856, %v1051
        %v1084 = vmul.f32 %v857, %v1052
        %v1085 = vmul.f32 %v858, %v1053
        %v1086 = vmul.f32 %v859, %v1054
        %v1087 = vmul.f32 %v860, %v1055
        %v1088 = vmul.f32 %v861, %v1056
        %v1089 = vmul.f32 %v862, %v1057
        %v1090 = vld [vmem:[%s296] sm:$0x3]
        %v1091 = vadd.f32 %v1058, %v1059
        %v1092 = vadd.f32 %v1091, %v1060
        %v1093 = vadd.f32 %v1092, %v1061
        %v1094 = vadd.f32 %v1093, %v1062
        %v1095 = vadd.f32 %v1094, %v1063
        %v1096 = vadd.f32 %v1095, %v1064
        %v1097 = vadd.f32 %v1096, %v1065
        %v1098 = vadd.f32 %v1097, %v1066
        %v1099 = vadd.f32 %v1098, %v1067
        %v1100 = vadd.f32 %v1099, %v1068
        %v1101 = vadd.f32 %v1100, %v1069
        %v1102 = vadd.f32 %v1101, %v1070
        %v1103 = vadd.f32 %v1102, %v1071
        %v1104 = vadd.f32 %v1103, %v1072
        %v1105 = vadd.f32 %v1104, %v1073
        %v1106 = vadd.f32 %v1105, %v1074
        %v1107 = vadd.f32 %v1106, %v1075
        %v1108 = vadd.f32 %v1107, %v1076
        %v1109 = vadd.f32 %v1108, %v1077
        %v1110 = vadd.f32 %v1109, %v1078
        %v1111 = vadd.f32 %v1110, %v1079
        %v1112 = vadd.f32 %v1111, %v1080
        %v1113 = vadd.f32 %v1112, %v1081
        %v1114 = vadd.f32 %v1113, %v1082
        %v1115 = vadd.f32 %v1114, %v1083
        %v1116 = vadd.f32 %v1115, %v1084
        %v1117 = vadd.f32 %v1116, %v1085
        %v1118 = vadd.f32 %v1117, %v1086
        %v1119 = vadd.f32 %v1118, %v1087
        %v1120 = vadd.f32 %v1119, %v1088
        %v1121 = vadd.f32 %v1120, %v1089
        %v1122 = vrot.slane %v1121, 4
        %v1123 = vadd.f32 %v1121, %v1122
        %v1124 = vrot.slane %v1123, 2
        %v1125 = vadd.f32 %v1123, %v1124
        %v1126 = vrot.slane %v1125, 1
        %v1127 = vadd.f32 %v1125, %v1126
        %v1128 = vmul.f32 %v1058, %v831
        %v1129 = vmul.f32 %v1059, %v832
        %v1130 = vmul.f32 %v1060, %v833
        %v1131 = vmul.f32 %v1061, %v834
        %v1132 = vmul.f32 %v1062, %v835
        %v1133 = vmul.f32 %v1063, %v836
        %v1134 = vmul.f32 %v1064, %v837
        %v1135 = vmul.f32 %v1065, %v838
        %v1136 = vmul.f32 %v1066, %v839
        %v1137 = vmul.f32 %v1067, %v840
        %v1138 = vmul.f32 %v1068, %v841
        %v1139 = vmul.f32 %v1069, %v842
        %v1140 = vmul.f32 %v1070, %v843
        %v1141 = vmul.f32 %v1071, %v844
        %v1142 = vmul.f32 %v1072, %v845
        %v1143 = vmul.f32 %v1073, %v846
        %v1144 = vmul.f32 %v1074, %v847
        %v1145 = vmul.f32 %v1075, %v848
        %v1146 = vmul.f32 %v1076, %v849
        %v1147 = vmul.f32 %v1077, %v850
        %v1148 = vmul.f32 %v1078, %v851
        %v1149 = vmul.f32 %v1079, %v852
        %v1150 = vmul.f32 %v1080, %v853
        %v1151 = vmul.f32 %v1081, %v854
        %v1152 = vmul.f32 %v1082, %v855
        %v1153 = vmul.f32 %v1083, %v856
        %v1154 = vmul.f32 %v1084, %v857
        %v1155 = vmul.f32 %v1085, %v858
        %v1156 = vmul.f32 %v1086, %v859
        %v1157 = vmul.f32 %v1087, %v860
        %v1158 = vmul.f32 %v1088, %v861
        %v1159 = vmul.f32 %v1089, %v862
        %v1160 = vadd.f32 %v1128, %v1129
        %v1161 = vadd.f32 %v1160, %v1130
        %v1162 = vadd.f32 %v1161, %v1131
        %v1163 = vadd.f32 %v1162, %v1132
        %v1164 = vadd.f32 %v1163, %v1133
        %v1165 = vadd.f32 %v1164, %v1134
        %v1166 = vadd.f32 %v1165, %v1135
        %v1167 = vadd.f32 %v1166, %v1136
        %v1168 = vadd.f32 %v1167, %v1137
        %v1169 = vadd.f32 %v1168, %v1138
        %v1170 = vadd.f32 %v1169, %v1139
        %v1171 = vadd.f32 %v1170, %v1140
        %v1172 = vadd.f32 %v1171, %v1141
        %v1173 = vadd.f32 %v1172, %v1142
        %v1174 = vadd.f32 %v1173, %v1143
        %v1175 = vadd.f32 %v1174, %v1144
        %v1176 = vadd.f32 %v1175, %v1145
        %v1177 = vadd.f32 %v1176, %v1146
        %v1178 = vadd.f32 %v1177, %v1147
        %v1179 = vadd.f32 %v1178, %v1148
        %v1180 = vadd.f32 %v1179, %v1149
        %v1181 = vadd.f32 %v1180, %v1150
        %v1182 = vadd.f32 %v1181, %v1151
        %v1183 = vadd.f32 %v1182, %v1152
        %v1184 = vadd.f32 %v1183, %v1153
        %v1185 = vadd.f32 %v1184, %v1154
        %v1186 = vadd.f32 %v1185, %v1155
        %v1187 = vadd.f32 %v1186, %v1156
        %v1188 = vadd.f32 %v1187, %v1157
        %v1189 = vadd.f32 %v1188, %v1158
        %v1190 = vadd.f32 %v1189, %v1159
        %v1191 = vrot.slane %v1190, 4
        %v1192 = vadd.f32 %v1190, %v1191
        %v1193 = vrot.slane %v1192, 2
        %v1194 = vadd.f32 %v1192, %v1193
        %v1195 = vrot.slane %v1194, 1
        %v1196 = vadd.f32 %v1194, %v1195
        %vm1197 = vcmask 1040384
        %v1198 = vsel %vm1197, %v1127, %v1196
        %v1199 = vadd.f32 %v1090, %v1198
        %1200 = vst [vmem:[%s296] sm:$0x3] %v1199
      $region44: #{unet_base_conv_forward.4} parent=31 // pred_fallthru
        _
      %s1201 = smul.u32 32, %s22
      %p1202 = scmp.lt.s32.totalorder %s1201, 63
      %s1203 = scalar_select %p1202, %s1201, 63
      %p1204 = scmp.lt.s32.totalorder %s21, 0
      %s1205 = scalar_select %p1204, %s21, 0
      %s1206 = sadd.s32 %s1205, %s1203
      %s1207 = smul.addr %s1206, 8
      %s1208 = scalar_lea.vmem %s3, %s1207
      %p1209 = scmp.lt.s32.totalorder %s21, 0
      %s1210 = scalar_select %p1209, %s21, 0
      %s1211 = smul.addr %s1210, 2
      %s1212 = scalar_lea.vmem %s4, %s1211
      // Predicated region
      $region45: #{unet_base_conv_forward.4} parent=31 // pred_check
        %p1213 = pneg %p137
      $region46: #{unet_base_conv_forward.4} parent=31 // pred_check_branch
        %1215 = sbr.rel (%p1213) target = $region48
      $region47: #{unet_base_conv_forward.4} parent=31 // pred_region
        %s1216 = smul.u32 32, %s22
      $region48: #{unet_base_conv_forward.4} parent=31 // pred_fallthru
        _
      // Predicated region
      $region49: #{unet_base_conv_forward.4} parent=31 // pred_check
        %p1217 = pneg %p163
      $region50: #{unet_base_conv_forward.4} parent=31 // pred_check_branch
        %1219 = sbr.rel (%p1217) target = $region52
      $region51: #{unet_base_conv_forward.4} parent=31 // pred_region
        _
      $region52: #{unet_base_conv_forward.4} parent=31 // pred_fallthru
        _
      // Predicated region
      $region53: #{unet_base_conv_forward.4} parent=31 // pred_check
        %p1220 = pneg %p163
      $region54: #{unet_base_conv_forward.4} parent=31 // pred_check_branch
        %1222 = sbr.rel (%p1220) target = $region56
      $region55: #{unet_base_conv_forward.4} parent=31 // pred_region
        %p1223 = scmp.lt.s32.totalorder %s21, 0
        %s1224 = scalar_select %p1223, %s21, 0
        %s1225 = smul.addr %s1224, 2
        %s1226 = scalar_lea.vmem %s4, %s1225
      $region56: #{unet_base_conv_forward.4} parent=31 // pred_fallthru
        _
    $region32: #{unet_base_conv_forward.4} parent=5 // pred_fallthru
      _
    %p1227 = scmp.le.s32.totalorder 2, %s11
    // Predicated region
    $region57: #{unet_base_conv_forward.4} parent=5 // pred_check
      %p1228 = pneg %p1227
    $region58: #{unet_base_conv_forward.4} parent=5 // pred_check_branch
      %1230 = sbr.rel (%p1228) target = $region60
    $region59: #{unet_base_conv_forward.4} parent=5 // pred_region
      %s1231 = ssub.s32 %s11, 2
      // Predicated region
      $region61: #{unet_base_conv_forward.4} parent=59 // pred_check
        %p1232 = pneg %p143
      $region62: #{unet_base_conv_forward.4} parent=59 // pred_check_branch
        %1234 = sbr.rel (%p1232) target = $region64
      $region63: #{unet_base_conv_forward.4} parent=59 // pred_region
        %s1235 = smul.u32 32, %s25
        %p1236 = scmp.lt.s32.totalorder %s1235, 63
        %s1237 = scalar_select %p1236, %s1235, 63
        %p1238 = scmp.lt.s32.totalorder %s24, 0
        %s1239 = scalar_select %p1238, %s24, 0
        %s1240 = sadd.s32 %s1239, %s1237
        %s1241 = smul.addr %s1240, 8
        %s1242 = scalar_lea.vmem %s3, %s1241
      $region64: #{unet_base_conv_forward.4} parent=59 // pred_fallthru
        _
    $region60: #{unet_base_conv_forward.4} parent=5 // pred_fallthru
      _
  $region6: #{unet_base_conv_forward.4} parent=0 // loop_footer
    %s15 = sadd.s32 1, %s11
  $region7: #{unet_base_conv_forward.4} parent=0 // loop_footer_branch
    %10 = sbr.rel target = $region3
  $region8: #{unet_base_conv_forward.4} parent=0 // loop_exit
    _

// kernel: unet_base_conv_forward.7
$region0: #{unet_base_conv_forward.7}
  #allocation0 [shape = 'u32[]', space=smem, size = 0x4, offset = 0x4, fixed_abs, tag = 'smem constant byte address 0x4 - core index']
  #allocation1 [shape = 'u32[144,128]{1,0:T(1,128)}', space=vmem, size = 0x12000, scoped, tag = 'internal scratch']
  %s0 = inlined_call_operand.vmem [shape: f32[512,128], index: 0, kind: input, shape index: {}]
  %s1 = inlined_call_operand.vmem [shape: f32[2,128], index: 1, kind: input, shape index: {}]
  %s2 = inlined_call_operand.vmem [shape: f32[1,128], index: 2, kind: input, shape index: {}]
  %s3 = inlined_call_operand.vmem [shape: f32[1,128], index: 3, kind: input, shape index: {}]
  %s4 = inlined_call_operand.vmem [shape: f32[512,128], index: 4, kind: output, shape index: {}]
  %s5 = sld [smem:[#allocation0]]
  $region49: #{unet_base_conv_forward.7} parent=0
    _
  %s7 = ssub.s32 1, %s5
  %s8 = scalar_select 0, %s7, %s5
  loop: start=0, step=1, limit=4
  $region2: #{unet_base_conv_forward.7} parent=0 // loop_pre_header
    _
  $region3: #{unet_base_conv_forward.7} parent=0 // loop_header
    %s10 = sphi 0, %s14
    %p11 = scmp.ge.s32.totalorder %s10, 4
    %s17 = sphi 0, %s29
    %s18 = sphi 0, %s25
    %s19 = sphi 0, %s17
    %s20 = sphi 0, %s18
    %s21 = sphi 0, %s19
    %s22 = sphi 0, %s20
    %s34 = sphi 0, %s36
    %s37 = sphi 0, %s34
    %s38 = sphi 0, %s37
    %s54 = sphi 0, %s38
    %s60 = sphi 0, %s62
    %s63 = sphi 0, %s60
    %s64 = sphi 0, %s63
    %s80 = sphi 0, %s64
    %s86 = sphi 0, %s88
    %s89 = sphi 0, %s86
    %s90 = sphi 0, %s89
    %s106 = sphi 0, %s90
    %s112 = sphi 0, %s114
    %s115 = sphi 0, %s112
    %s116 = sphi 0, %s115
    %s132 = sphi 0, %s116
    %s140 = sphi 0, %s142
    %s143 = sphi 0, %s140
    %s144 = sphi 0, %s143
    %s160 = sphi 0, %s144
  $region4: #{unet_base_conv_forward.7} parent=0 // loop_header_branch
    %13 = sbr.rel (%p11) target = $region8
  $region5: #{unet_base_conv_forward.7} parent=0 // loop_body
    %s15 = ssub.s32 %s10, 1
    %s16 = ssub.s32 %s10, 2
    %s23 = sadd.s32 1, %s18
    %p24 = scmp.ge.s32.totalorder %s23, 1
    %s25 = scalar_select %p24, 0, %s23
    %s26 = sadd.s32 1, %s17
    %s27 = scalar_select %p24, %s26, %s17
    %p28 = scmp.ge.s32.totalorder %s27, 2
    %s29 = scalar_select %p28, 0, %s27
    %s30 = ssub.s32 %s17, %s29
    %s31 = ssub.s32 %s18, %s25
    %s32 = sor.u32 %s30, %s31
    %p33 = scmp.eq.s32.totalorder %s32, 0
    %s35 = sadd.s32 %s34, 1
    %s36 = scalar_select %p33, %s34, %s35
    %p39 = pneg %p33
    %p40 = scmp.eq.s32.totalorder %s10, 1
    %p41 = por %p39, %p40
    %p42 = scmp.ne.s32.totalorder %s34, %s37
    %p43 = scmp.eq.s32.totalorder %s10, 0
    %p44 = por %p42, %p43
    %p45 = scmp.ne.s32.totalorder %s34, %s37
    %p46 = scmp.eq.s32.totalorder %s15, 1
    %p47 = por %p45, %p46
    %p48 = scmp.ne.s32.totalorder %s37, %s38
    %p49 = scmp.eq.s32.totalorder %s15, 0
    %p50 = por %p48, %p49
    %p51 = scmp.ne.s32.totalorder %s37, %s38
    %p52 = scmp.eq.s32.totalorder %s16, 1
    %p53 = por %p51, %p52
    %p55 = scmp.ne.s32.totalorder %s38, %s54
    %p56 = scmp.eq.s32.totalorder %s16, 0
    %p57 = por %p55, %p56
    %s58 = ssub.s32 %s18, %s25
    %p59 = scmp.eq.s32.totalorder %s58, 0
    %s61 = sadd.s32 %s60, 1
    %s62 = scalar_select %p59, %s60, %s61
    %p65 = pneg %p59
    %p66 = scmp.eq.s32.totalorder %s10, 1
    %p67 = por %p65, %p66
    %p68 = scmp.ne.s32.totalorder %s60, %s63
    %p69 = scmp.eq.s32.totalorder %s10, 0
    %p70 = por %p68, %p69
    %p71 = scmp.ne.s32.totalorder %s60, %s63
    %p72 = scmp.eq.s32.totalorder %s15, 1
    %p73 = por %p71, %p72
    %p74 = scmp.ne.s32.totalorder %s63, %s64
    %p75 = scmp.eq.s32.totalorder %s15, 0
    %p76 = por %p74, %p75
    %p77 = scmp.ne.s32.totalorder %s63, %s64
    %p78 = scmp.eq.s32.totalorder %s16, 1
    %p79 = por %p77, %p78
    %p81 = scmp.ne.s32.totalorder %s64, %s80
    %p82 = scmp.eq.s32.totalorder %s16, 0
    %p83 = por %p81, %p82
    %s84 = ssub.s32 %s18, %s25
    %p85 = scmp.eq.s32.totalorder %s84, 0
    %s87 = sadd.s32 %s86, 1
    %s88 = scalar_select %p85, %s86, %s87
    %p91 = pneg %p85
    %p92 = scmp.eq.s32.totalorder %s10, 1
    %p93 = por %p91, %p92
    %p94 = scmp.ne.s32.totalorder %s86, %s89
    %p95 = scmp.eq.s32.totalorder %s10, 0
    %p96 = por %p94, %p95
    %p97 = scmp.ne.s32.totalorder %s86, %s89
    %p98 = scmp.eq.s32.totalorder %s15, 1
    %p99 = por %p97, %p98
    %p100 = scmp.ne.s32.totalorder %s89, %s90
    %p101 = scmp.eq.s32.totalorder %s15, 0
    %p102 = por %p100, %p101
    %p103 = scmp.ne.s32.totalorder %s89, %s90
    %p104 = scmp.eq.s32.totalorder %s16, 1
    %p105 = por %p103, %p104
    %p107 = scmp.ne.s32.totalorder %s90, %s106
    %p108 = scmp.eq.s32.totalorder %s16, 0
    %p109 = por %p107, %p108
    %s110 = ssub.s32 %s18, %s25
    %p111 = scmp.eq.s32.totalorder %s110, 0
    %s113 = sadd.s32 %s112, 1
    %s114 = scalar_select %p111, %s112, %s113
    %p117 = pneg %p111
    %p118 = scmp.eq.s32.totalorder %s10, 1
    %p119 = por %p117, %p118
    %p120 = scmp.ne.s32.totalorder %s112, %s115
    %p121 = scmp.eq.s32.totalorder %s10, 0
    %p122 = por %p120, %p121
    %p123 = scmp.ne.s32.totalorder %s112, %s115
    %p124 = scmp.eq.s32.totalorder %s15, 1
    %p125 = por %p123, %p124
    %p126 = scmp.ne.s32.totalorder %s115, %s116
    %p127 = scmp.eq.s32.totalorder %s15, 0
    %p128 = por %p126, %p127
    %p129 = scmp.ne.s32.totalorder %s115, %s116
    %p130 = scmp.eq.s32.totalorder %s16, 1
    %p131 = por %p129, %p130
    %p133 = scmp.ne.s32.totalorder %s116, %s132
    %p134 = scmp.eq.s32.totalorder %s16, 0
    %p135 = por %p133, %p134
    %s136 = ssub.s32 %s17, %s29
    %s137 = ssub.s32 %s18, %s25
    %s138 = sor.u32 %s136, %s137
    %p139 = scmp.eq.s32.totalorder %s138, 0
    %s141 = sadd.s32 %s140, 1
    %s142 = scalar_select %p139, %s140, %s141
    %p145 = pneg %p139
    %p146 = scmp.eq.s32.totalorder %s10, 1
    %p147 = por %p145, %p146
    %p148 = scmp.ne.s32.totalorder %s140, %s143
    %p149 = scmp.eq.s32.totalorder %s10, 0
    %p150 = por %p148, %p149
    %p151 = scmp.ne.s32.totalorder %s140, %s143
    %p152 = scmp.eq.s32.totalorder %s15, 1
    %p153 = por %p151, %p152
    %p154 = scmp.ne.s32.totalorder %s143, %s144
    %p155 = scmp.eq.s32.totalorder %s15, 0
    %p156 = por %p154, %p155
    %p157 = scmp.ne.s32.totalorder %s143, %s144
    %p158 = scmp.eq.s32.totalorder %s16, 1
    %p159 = por %p157, %p158
    %p161 = scmp.ne.s32.totalorder %s144, %s160
    %p162 = scmp.eq.s32.totalorder %s16, 0
    %p163 = por %p161, %p162
    %p164 = scmp.le.s32.totalorder 1, %s10
    %p165 = scmp.lt.s32.totalorder %s10, 3
    %p166 = pnand %p164, %p165
    %p167 = pneg %p166
    // Predicated region
    $region9: #{unet_base_conv_forward.7} parent=5 // pred_check
      _
    $region10: #{unet_base_conv_forward.7} parent=5 // pred_check_branch
      %169 = sbr.rel (%p166) target = $region12
    $region11: #{unet_base_conv_forward.7} parent=5 // pred_region
      %s170 = ssub.s32 %s10, 1
      // Predicated region
      $region13: #{unet_base_conv_forward.7} parent=11 // pred_check
        %p171 = pneg %p76
      $region14: #{unet_base_conv_forward.7} parent=11 // pred_check_branch
        %173 = sbr.rel (%p171) target = $region16
      $region15: #{unet_base_conv_forward.7} parent=11 // pred_region
        %p174 = scmp.lt.s32.totalorder %s20, 0
        %s175 = scalar_select %p174, %s20, 0
        %s176 = smul.addr %s175, 2
        %s177 = scalar_lea.vmem %s1, %s176
      $region16: #{unet_base_conv_forward.7} parent=11 // pred_fallthru
        _
      // Predicated region
      $region17: #{unet_base_conv_forward.7} parent=11 // pred_check
        %p178 = pneg %p102
      $region18: #{unet_base_conv_forward.7} parent=11 // pred_check_branch
        %180 = sbr.rel (%p178) target = $region20
      $region19: #{unet_base_conv_forward.7} parent=11 // pred_region
        %p181 = scmp.lt.s32.totalorder %s20, 0
        %s182 = scalar_select %p181, %s20, 0
        %s183 = scalar_lea.vmem %s2, %s182
      $region20: #{unet_base_conv_forward.7} parent=11 // pred_fallthru
        _
      // Predicated region
      $region21: #{unet_base_conv_forward.7} parent=11 // pred_check
        %p184 = pneg %p128
      $region22: #{unet_base_conv_forward.7} parent=11 // pred_check_branch
        %186 = sbr.rel (%p184) target = $region24
      $region23: #{unet_base_conv_forward.7} parent=11 // pred_region
        %p187 = scmp.lt.s32.totalorder %s20, 0
        %s188 = scalar_select %p187, %s20, 0
        %s189 = scalar_lea.vmem %s3, %s188
      $region24: #{unet_base_conv_forward.7} parent=11 // pred_fallthru
        _
    $region12: #{unet_base_conv_forward.7} parent=5 // pred_fallthru
      _
    %p190 = scmp.lt.s32.totalorder %s10, 2
    // Predicated region
    $region25: #{unet_base_conv_forward.7} parent=5 // pred_check
      %p191 = pneg %p190
    $region26: #{unet_base_conv_forward.7} parent=5 // pred_check_branch
      %193 = sbr.rel (%p191) target = $region28
    $region27: #{unet_base_conv_forward.7} parent=5 // pred_region
      // Predicated region
      $region29: #{unet_base_conv_forward.7} parent=27 // pred_check
        %p194 = pneg %p44
      $region30: #{unet_base_conv_forward.7} parent=27 // pred_check_branch
        %196 = sbr.rel (%p194) target = $region32
      $region31: #{unet_base_conv_forward.7} parent=27 // pred_region
        %s197 = smul.u32 32, %s17
        %p198 = scmp.lt.s32.totalorder %s197, 63
        %s199 = scalar_select %p198, %s197, 63
        %p200 = scmp.lt.s32.totalorder %s18, 0
        %s201 = scalar_select %p200, %s18, 0
        %s202 = sadd.s32 %s201, %s199
        %s203 = smul.addr %s202, 8
        %s204 = scalar_lea.vmem %s0, %s203
        %s205 = smul.u32 32, %s17
      $region32: #{unet_base_conv_forward.7} parent=27 // pred_fallthru
        _
    $region28: #{unet_base_conv_forward.7} parent=5 // pred_fallthru
      _
    %p206 = scmp.le.s32.totalorder 1, %s10
    %p207 = scmp.lt.s32.totalorder %s10, 3
    %p208 = pnand %p206, %p207
    %p209 = pneg %p208
    // Predicated region
    $region33: #{unet_base_conv_forward.7} parent=5 // pred_check
      _
    $region34: #{unet_base_conv_forward.7} parent=5 // pred_check_branch
      %211 = sbr.rel (%p208) target = $region36
    $region35: #{unet_base_conv_forward.7} parent=5 // pred_region
      %s212 = ssub.s32 %s10, 1
      %s213 = smul.u32 32, %s19
      %p214 = scmp.lt.s32.totalorder %s213, 63
      %s215 = scalar_select %p214, %s213, 63
      %p216 = scmp.lt.s32.totalorder %s20, 0
      %s217 = scalar_select %p216, %s20, 0
      %s218 = sadd.s32 %s217, %s215
      %s219 = smul.addr %s218, 8
      %s220 = scalar_lea.vmem %s0, %s219
      %p221 = pneg %p50
      %p222 = pneg %p47
      %p223 = scmp.lt.s32.totalorder %s20, 0
      %s224 = scalar_select %p223, %s20, 0
      %s225 = smul.addr %s224, 2
      %s226 = scalar_lea.vmem %s1, %s225
      %p227 = pneg %p76
      %p228 = pneg %p73
      %p229 = scmp.lt.s32.totalorder %s20, 0
      %s230 = scalar_select %p229, %s20, 0
      %s231 = scalar_lea.vmem %s2, %s230
      %p232 = pneg %p102
      %p233 = pneg %p99
      %p234 = scmp.lt.s32.totalorder %s20, 0
      %s235 = scalar_select %p234, %s20, 0
      %s236 = scalar_lea.vmem %s3, %s235
      %p237 = pneg %p128
      %p238 = pneg %p125
      %p239 = pneg %p156
      %p240 = pneg %p153
      %s241 = smul.u32 32, %s19
      %p242 = scmp.lt.s32.totalorder %s241, 63
      %s243 = scalar_select %p242, %s241, 63
      %p244 = scmp.lt.s32.totalorder %s20, 0
      %s245 = scalar_select %p244, %s20, 0
      %s246 = sadd.s32 %s245, %s243
      %s247 = smul.addr %s246, 8
      %s248 = scalar_lea.vmem %s4, %s247
      %s249 = smul.u32 32, %s19
      %p250 = scmp.lt.s32.totalorder %s249, 63
      %s251 = scalar_select %p250, %s249, 63
      %p252 = scmp.lt.s32.totalorder %s20, 0
      %s253 = scalar_select %p252, %s20, 0
      %s254 = sadd.s32 %s253, %s251
      %s255 = smul.addr %s254, 8
      %s256 = scalar_lea.vmem %s0, %s255
      %s257 = smul.u32 32, %s19
      %p258 = scmp.lt.s32.totalorder %s20, 0
      %s259 = scalar_select %p258, %s20, 0
      %s260 = smul.addr %s259, 2
      %s261 = scalar_lea.vmem %s1, %s260
      %p262 = scmp.lt.s32.totalorder %s20, 0
      %s263 = scalar_select %p262, %s20, 0
      %s264 = scalar_lea.vmem %s2, %s263
      %p265 = scmp.lt.s32.totalorder %s20, 0
      %s266 = scalar_select %p265, %s20, 0
      %s267 = scalar_lea.vmem %s3, %s266
      %s268 = smul.u32 32, %s19
      %p269 = scmp.lt.s32.totalorder %s268, 63
      %s270 = scalar_select %p269, %s268, 63
      %p271 = scmp.lt.s32.totalorder %s20, 0
      %s272 = scalar_select %p271, %s20, 0
      %s273 = sadd.s32 %s272, %s270
      %s274 = smul.addr %s273, 8
      %s275 = scalar_lea.vmem %s4, %s274
      %s276 = smul.u32 32, %s19
      %v277 = vld [vmem:[%s261] sm:$0x3]
      %v278 = vmul.f32 %v277, 0.001953125
      %v279 = vmul.f32 %v278, %v278
      %v281 = vrot.slane %v279, 7
      %v283 = vsub.f32 %v278, %v281
      %v284 = vld [vmem:[%s264] sm:$0x1]
      %v285 = vadd.f32 %v283, 1e-05
      %v286 = vrsqrt.pop %v285
      %v289 = vunpack.c.l.s4 1966171168
      %v290 = vunpack.c.0.s8 %v289
      %v291 = vlaneseq
      %v292 = vshrl.u32 %v291, 7
      %v293 = vsub.s32 %v290, %v292
      %v294 = vrot.slane %v286, %v293
      %v295 = vcombine.high %v294, %v294
      %v297 = vunpack.c.l.s4 1966171168
      %v298 = vunpack.c.0.s8 %v297
      %v299 = vlaneseq
      %v300 = vshrl.u32 %v299, 7
      %v301 = vsub.s32 %v298, %v300
      %v302 = vrot.slane %v295, %v301
      %v304 = vmul.f32 %v284, %v302
      %v305 = vld [vmem:[%s267] sm:$0x1]
      %v306 = vmul.f32 %v278, %v304
      %v307 = vsub.f32 %v305, %v306
      %v308 = vld [vmem:[%s256] sm:$0xff]
      %v309 = vld [vmem:[%s256 + $0x8] sm:$0xff]
      %v310 = vld [vmem:[%s256 + $0x10] sm:$0xff]
      %v311 = vld [vmem:[%s256 + $0x18] sm:$0xff]
      %v312 = vld [vmem:[%s256 + $0x20] sm:$0xff]
      %v313 = vld [vmem:[%s256 + $0x28] sm:$0xff]
      %v314 = vld [vmem:[%s256 + $0x30] sm:$0xff]
      %v315 = vld [vmem:[%s256 + $0x38] sm:$0xff]
      %v316 = vld [vmem:[%s256 + $0x40] sm:$0xff]
      %v317 = vld [vmem:[%s256 + $0x48] sm:$0xff]
      %v318 = vld [vmem:[%s256 + $0x50] sm:$0xff]
      %v319 = vld [vmem:[%s256 + $0x58] sm:$0xff]
      %v320 = vld [vmem:[%s256 + $0x60] sm:$0xff]
      %v321 = vld [vmem:[%s256 + $0x68] sm:$0xff]
      %v322 = vld [vmem:[%s256 + $0x70] sm:$0xff]
      %v323 = vld [vmem:[%s256 + $0x78] sm:$0xff]
      %v324 = vld [vmem:[%s256 + $0x80] sm:$0xff]
      %v325 = vld [vmem:[%s256 + $0x88] sm:$0xff]
      %v326 = vld [vmem:[%s256 + $0x90] sm:$0xff]
      %v327 = vld [vmem:[%s256 + $0x98] sm:$0xff]
      %v328 = vld [vmem:[%s256 + $0xa0] sm:$0xff]
      %v329 = vld [vmem:[%s256 + $0xa8] sm:$0xff]
      %v330 = vld [vmem:[%s256 + $0xb0] sm:$0xff]
      %v331 = vld [vmem:[%s256 + $0xb8] sm:$0xff]
      %v332 = vld [vmem:[%s256 + $0xc0] sm:$0xff]
      %v333 = vld [vmem:[%s256 + $0xc8] sm:$0xff]
      %v334 = vld [vmem:[%s256 + $0xd0] sm:$0xff]
      %v335 = vld [vmem:[%s256 + $0xd8] sm:$0xff]
      %v336 = vld [vmem:[%s256 + $0xe0] sm:$0xff]
      %v337 = vld [vmem:[%s256 + $0xe8] sm:$0xff]
      %v338 = vld [vmem:[%s256 + $0xf0] sm:$0xff]
      %v339 = vld [vmem:[%s256 + $0xf8] sm:$0xff]
      %v341 = vlaneseq
      %v342 = vshrl.u32 %v341, 7
      %v343 = vsub.s32 0, %v342
      %v344 = vrot.slane %v304, %v343
      %v346 = vmul.f32 %v308, %v344
      %v347 = vmul.f32 %v309, %v344
      %v348 = vmul.f32 %v310, %v344
      %v349 = vmul.f32 %v311, %v344
      %v350 = vmul.f32 %v312, %v344
      %v351 = vmul.f32 %v313, %v344
      %v352 = vmul.f32 %v314, %v344
      %v353 = vmul.f32 %v315, %v344
      %v354 = vmul.f32 %v316, %v344
      %v355 = vmul.f32 %v317, %v344
      %v356 = vmul.f32 %v318, %v344
      %v357 = vmul.f32 %v319, %v344
      %v358 = vmul.f32 %v320, %v344
      %v359 = vmul.f32 %v321, %v344
      %v360 = vmul.f32 %v322, %v344
      %v361 = vmul.f32 %v323, %v344
      %v362 = vmul.f32 %v324, %v344
      %v363 = vmul.f32 %v325, %v344
      %v364 = vmul.f32 %v326, %v344
      %v365 = vmul.f32 %v327, %v344
      %v366 = vmul.f32 %v328, %v344
      %v367 = vmul.f32 %v329, %v344
      %v368 = vmul.f32 %v330, %v344
      %v369 = vmul.f32 %v331, %v344
      %v370 = vmul.f32 %v332, %v344
      %v371 = vmul.f32 %v333, %v344
      %v372 = vmul.f32 %v334, %v344
      %v373 = vmul.f32 %v335, %v344
      %v374 = vmul.f32 %v336, %v344
      %v375 = vmul.f32 %v337, %v344
      %v376 = vmul.f32 %v338, %v344
      %v377 = vmul.f32 %v339, %v344
      %v379 = vlaneseq
      %v380 = vshrl.u32 %v379, 7
      %v381 = vsub.s32 0, %v380
      %v382 = vrot.slane %v307, %v381
      %v384 = vadd.f32 %v346, %v382
      %v385 = vadd.f32 %v347, %v382
      %v386 = vadd.f32 %v348, %v382
      %v387 = vadd.f32 %v349, %v382
      %v388 = vadd.f32 %v350, %v382
      %v389 = vadd.f32 %v351, %v382
      %v390 = vadd.f32 %v352, %v382
      %v391 = vadd.f32 %v353, %v382
      %v392 = vadd.f32 %v354, %v382
      %v393 = vadd.f32 %v355, %v382
      %v394 = vadd.f32 %v356, %v382
      %v395 = vadd.f32 %v357, %v382
      %v396 = vadd.f32 %v358, %v382
      %v397 = vadd.f32 %v359, %v382
      %v398 = vadd.f32 %v360, %v382
      %v399 = vadd.f32 %v361, %v382
      %v400 = vadd.f32 %v362, %v382
      %v401 = vadd.f32 %v363, %v382
      %v402 = vadd.f32 %v364, %v382
      %v403 = vadd.f32 %v365, %v382
      %v404 = vadd.f32 %v366, %v382
      %v405 = vadd.f32 %v367, %v382
      %v406 = vadd.f32 %v368, %v382
      %v407 = vadd.f32 %v369, %v382
      %v408 = vadd.f32 %v370, %v382
      %v409 = vadd.f32 %v371, %v382
      %v410 = vadd.f32 %v372, %v382
      %v411 = vadd.f32 %v373, %v382
      %v412 = vadd.f32 %v374, %v382
      %v413 = vadd.f32 %v375, %v382
      %v414 = vadd.f32 %v376, %v382
      %v415 = vadd.f32 %v377, %v382
      %v416 = vmax.f32 %v384, 0.0
      %v417 = vmax.f32 %v385, 0.0
      %v418 = vmax.f32 %v386, 0.0
      %v419 = vmax.f32 %v387, 0.0
      %v420 = vmax.f32 %v388, 0.0
      %v421 = vmax.f32 %v389, 0.0
      %v422 = vmax.f32 %v390, 0.0
      %v423 = vmax.f32 %v391, 0.0
      %v424 = vmax.f32 %v392, 0.0
      %v425 = vmax.f32 %v393, 0.0
      %v426 = vmax.f32 %v394, 0.0
      %v427 = vmax.f32 %v395, 0.0
      %v428 = vmax.f32 %v396, 0.0
      %v429 = vmax.f32 %v397, 0.0
      %v430 = vmax.f32 %v398, 0.0
      %v431 = vmax.f32 %v399, 0.0
      %v432 = vmax.f32 %v400, 0.0
      %v433 = vmax.f32 %v401, 0.0
      %v434 = vmax.f32 %v402, 0.0
      %v435 = vmax.f32 %v403, 0.0
      %v436 = vmax.f32 %v404, 0.0
      %v437 = vmax.f32 %v405, 0.0
      %v438 = vmax.f32 %v406, 0.0
      %v439 = vmax.f32 %v407, 0.0
      %v440 = vmax.f32 %v408, 0.0
      %v441 = vmax.f32 %v409, 0.0
      %v442 = vmax.f32 %v410, 0.0
      %v443 = vmax.f32 %v411, 0.0
      %v444 = vmax.f32 %v412, 0.0
      %v445 = vmax.f32 %v413, 0.0
      %v446 = vmax.f32 %v414, 0.0
      %v447 = vmax.f32 %v415, 0.0
      %448 = vst [vmem:[%s275] sm:$0xff] %v416
      %449 = vst [vmem:[%s275 + $0x8] sm:$0xff] %v417
      %450 = vst [vmem:[%s275 + $0x10] sm:$0xff] %v418
      %451 = vst [vmem:[%s275 + $0x18] sm:$0xff] %v419
      %452 = vst [vmem:[%s275 + $0x20] sm:$0xff] %v420
      %453 = vst [vmem:[%s275 + $0x28] sm:$0xff] %v421
      %454 = vst [vmem:[%s275 + $0x30] sm:$0xff] %v422
      %455 = vst [vmem:[%s275 + $0x38] sm:$0xff] %v423
      %456 = vst [vmem:[%s275 + $0x40] sm:$0xff] %v424
      %457 = vst [vmem:[%s275 + $0x48] sm:$0xff] %v425
      %458 = vst [vmem:[%s275 + $0x50] sm:$0xff] %v426
      %459 = vst [vmem:[%s275 + $0x58] sm:$0xff] %v427
      %460 = vst [vmem:[%s275 + $0x60] sm:$0xff] %v428
      %461 = vst [vmem:[%s275 + $0x68] sm:$0xff] %v429
      %462 = vst [vmem:[%s275 + $0x70] sm:$0xff] %v430
      %463 = vst [vmem:[%s275 + $0x78] sm:$0xff] %v431
      %464 = vst [vmem:[%s275 + $0x80] sm:$0xff] %v432
      %465 = vst [vmem:[%s275 + $0x88] sm:$0xff] %v433
      %466 = vst [vmem:[%s275 + $0x90] sm:$0xff] %v434
      %467 = vst [vmem:[%s275 + $0x98] sm:$0xff] %v435
      %468 = vst [vmem:[%s275 + $0xa0] sm:$0xff] %v436
      %469 = vst [vmem:[%s275 + $0xa8] sm:$0xff] %v437
      %470 = vst [vmem:[%s275 + $0xb0] sm:$0xff] %v438
      %471 = vst [vmem:[%s275 + $0xb8] sm:$0xff] %v439
      %472 = vst [vmem:[%s275 + $0xc0] sm:$0xff] %v440
      %473 = vst [vmem:[%s275 + $0xc8] sm:$0xff] %v441
      %474 = vst [vmem:[%s275 + $0xd0] sm:$0xff] %v442
      %475 = vst [vmem:[%s275 + $0xd8] sm:$0xff] %v443
      %476 = vst [vmem:[%s275 + $0xe0] sm:$0xff] %v444
      %477 = vst [vmem:[%s275 + $0xe8] sm:$0xff] %v445
      %478 = vst [vmem:[%s275 + $0xf0] sm:$0xff] %v446
      %479 = vst [vmem:[%s275 + $0xf8] sm:$0xff] %v447
      %s480 = smul.u32 32, %s19
      %p481 = scmp.lt.s32.totalorder %s480, 63
      %s482 = scalar_select %p481, %s480, 63
      %p483 = scmp.lt.s32.totalorder %s20, 0
      %s484 = scalar_select %p483, %s20, 0
      %s485 = sadd.s32 %s484, %s482
      %s486 = smul.addr %s485, 8
      %s487 = scalar_lea.vmem %s4, %s486
      // Predicated region
      $region37: #{unet_base_conv_forward.7} parent=35 // pred_check
        %p488 = pneg %p153
      $region38: #{unet_base_conv_forward.7} parent=35 // pred_check_branch
        %490 = sbr.rel (%p488) target = $region40
      $region39: #{unet_base_conv_forward.7} parent=35 // pred_region
        %s491 = smul.u32 32, %s19
      $region40: #{unet_base_conv_forward.7} parent=35 // pred_fallthru
        _
    $region36: #{unet_base_conv_forward.7} parent=5 // pred_fallthru
      _
    %p492 = scmp.le.s32.totalorder 2, %s10
    // Predicated region
    $region41: #{unet_base_conv_forward.7} parent=5 // pred_check
      %p493 = pneg %p492
    $region42: #{unet_base_conv_forward.7} parent=5 // pred_check_branch
      %495 = sbr.rel (%p493) target = $region44
    $region43: #{unet_base_conv_forward.7} parent=5 // pred_region
      %s496 = ssub.s32 %s10, 2
      // Predicated region
      $region45: #{unet_base_conv_forward.7} parent=43 // pred_check
        %p497 = pneg %p159
      $region46: #{unet_base_conv_forward.7} parent=43 // pred_check_branch
        %499 = sbr.rel (%p497) target = $region48
      $region47: #{unet_base_conv_forward.7} parent=43 // pred_region
        %s500 = smul.u32 32, %s21
        %p501 = scmp.lt.s32.totalorder %s500, 63
        %s502 = scalar_select %p501, %s500, 63
        %p503 = scmp.lt.s32.totalorder %s22, 0
        %s504 = scalar_select %p503, %s22, 0
        %s505 = sadd.s32 %s504, %s502
        %s506 = smul.addr %s505, 8
        %s507 = scalar_lea.vmem %s4, %s506
      $region48: #{unet_base_conv_forward.7} parent=43 // pred_fallthru
        _
    $region44: #{unet_base_conv_forward.7} parent=5 // pred_fallthru
      _
  $region6: #{unet_base_conv_forward.7} parent=0 // loop_footer
    %s14 = sadd.s32 1, %s10
  $region7: #{unet_base_conv_forward.7} parent=0 // loop_footer_branch
    %9 = sbr.rel target = $region3
  $region8: #{unet_base_conv_forward.7} parent=0 // loop_exit
    _

</llo_original>
